<compile_context>
chip_gen: v6e
topology: v6e:2x2x1
jax: 0.10.0
libtpu: 0.0.40
codegen_flags: <defaults>
</compile_context>

<pallas_src>
import jax
import jax.numpy as jnp
from jax.experimental import pallas as pl
from jax.experimental.pallas import tpu as pltpu


# Explicit scoped-VMEM budget (defaults are only 16 MiB on v5e / 32 MiB on v6e;
# 64 MiB also fits v7x physical VMEM).
_VMEM_LIMIT_BYTES = 64 * 1024 * 1024


# ----------------------------- Pallas kernels --------------------------------

def _make_norm_qkv_kernel(inv_count, eps):
    """GroupNorm(32, eps, affine) + fused q/k/v 1x1-conv projections, one batch per step.

    Channels-first layout: x block is (C, HW); per-channel params are (C, 1) columns.
    """
    def kernel(x_ref, a_ref, gamma_ref, beta_ref, w_ref, b_ref, qkv_ref):
        x = x_ref[0]                                             # (C, HW) f32
        # --- GroupNorm stats: reduce over HW first (XLU), then group-sum over the
        #     channel axis with the (C, C) group-membership matrix (tiny MXU dot).
        ch_sum = jnp.sum(x, axis=1, keepdims=True)               # (C, 1)
        mean = jnp.dot(a_ref[...], ch_sum,
                       preferred_element_type=jnp.float32) * inv_count
        xc = x - mean                                            # mean-centred variance
        ch_sq = jnp.sum(xc * xc, axis=1, keepdims=True)          # (C, 1)
        var = jnp.dot(a_ref[...], ch_sq,
                      preferred_element_type=jnp.float32) * inv_count
        scale = gamma_ref[...] * jax.lax.rsqrt(var + eps)        # (C, 1)
        xn = (xc * scale + beta_ref[...]).astype(jnp.bfloat16)   # bf16 only at the MXU edge
        # --- fused q/k/v: one wide (3C, C) @ (C, HW) bf16 matmul, f32 accumulation.
        qkv = jnp.dot(w_ref[...], xn, preferred_element_type=jnp.float32)
        qkv_ref[0] = (qkv + b_ref[...]).astype(jnp.bfloat16)     # (3C, HW) bf16
    return kernel


def _attn_proj_kernel(q_ref, k_ref, v_ref, wp_ref, bp_ref, xres_ref, o_ref):
    """Per q-tile: softmax(q^T k) v, then proj_out 1x1 conv + bias + residual add.

    Channels-first operands; the C^-0.5 scale is pre-folded into the q projection.
    The (tq, HW) score tile only ever lives in VMEM / vregs, never in HBM.
    """
    q = q_ref[0]                                                 # (C, tq)  bf16 (pre-scaled)
    k = k_ref[0]                                                 # (C, HW)  bf16
    v = v_ref[0]                                                 # (C, HW)  bf16
    s = jnp.dot(q.T, k, preferred_element_type=jnp.float32)      # (tq, HW) f32
    m = jnp.max(s, axis=-1, keepdims=True)
    p = jnp.exp(s - m)                                           # softmax kept in f32
    denom = jnp.sum(p, axis=-1, keepdims=True)                   # (tq, 1)
    p = (p * pl.reciprocal(denom, approx=True)).astype(jnp.bfloat16)
    # attn[c, i] = sum_j v[c, j] * p[i, j]   (RHS-transposed contraction, MXU-native)
    attn = jax.lax.dot_general(v, p, (((1,), (1,)), ((), ())),
                               preferred_element_type=jnp.float32)   # (C, tq) f32
    h = jnp.dot(wp_ref[...], attn.astype(jnp.bfloat16),
                preferred_element_type=jnp.float32)                  # (C, tq) f32
    o_ref[0] = h + bp_ref[...] + xres_ref[0]                         # + bias + residual


def _pick_q_tile(hw, batch):
    """Largest q tile in {512, 256, 128} dividing HW, keeping the (tq, HW) f32 score
    tile <= 8 MiB and (when possible) >= 2 grid cells for megacore sharding."""
    cands = [c for c in (512, 256, 128)
             if hw % c == 0 and hw * c * 4 <= (8 << 20)]
    for c in cands:
        if batch * (hw // c) >= 2:
            return c
    if cands:
        return cands[0]
    # TODO(synk): pad the q axis instead of falling back to a full-HW tile when H*W is
    # not a multiple of 128 (VMEM hazard for large ragged HW).
    return hw


# ------------------------------ Module wrapper --------------------------------

class AttnBlockPallas:
    """Pallas-TPU AttnBlock: GroupNorm -> q/k/v -> softmax(q k^T / sqrt(C)) v ->
    proj_out -> + residual.  NCHW in / NCHW out."""

    def __init__(self, in_channels, key, num_groups=32, eps=1e-6):
        assert in_channels % num_groups == 0
        self.in_channels = in_channels
        self.num_groups = num_groups
        self.eps = eps
        C = in_channels
        ks = jax.random.split(key, 10)
        # Reference (torch-layout, f32) parameters.
        self.gamma = 1.0 + 0.1 * jax.random.normal(ks[0], (C,), dtype=jnp.float32)
        self.beta = 0.1 * jax.random.normal(ks[1], (C,), dtype=jnp.float32)
        self.wq = 0.1 * jax.random.normal(ks[2], (C, C), dtype=jnp.float32)
        self.bq = 0.05 * jax.random.normal(ks[3], (C,), dtype=jnp.float32)
        self.wk = 0.1 * jax.random.normal(ks[4], (C, C), dtype=jnp.float32)
        self.bk = 0.05 * jax.random.normal(ks[5], (C,), dtype=jnp.float32)
        self.wv = 0.1 * jax.random.normal(ks[6], (C, C), dtype=jnp.float32)
        self.bv = 0.05 * jax.random.normal(ks[7], (C,), dtype=jnp.float32)
        self.wp = 0.1 * jax.random.normal(ks[8], (C, C), dtype=jnp.float32)
        self.bp = 0.05 * jax.random.normal(ks[9], (C,), dtype=jnp.float32)

        # ---- kernel-side parameters, precomputed once at __init__ ----
        # Attention scale C^-0.5 folded into the q projection (free, softmax-invariant).
        sc = float(C) ** (-0.5)
        # Fused qkv weight: torch [out, in] layout is exactly the (3C, C) @ (C, HW)
        # left operand in channels-first layout -> no weight transposes anywhere.
        self.w_qkv = jnp.concatenate([self.wq * sc, self.wk, self.wv], axis=0
                                     ).astype(jnp.bfloat16)              # (3C, C) bf16
        self.b_qkv = jnp.concatenate([self.bq * sc, self.bk, self.bv]
                                     ).reshape(3 * C, 1)                 # (3C, 1) f32
        self.w_proj = self.wp.astype(jnp.bfloat16)                       # (C, C)  bf16
        self._b_proj_col = self.bp.reshape(C, 1)                         # (C, 1)  f32
        self._gamma_col = self.gamma.reshape(C, 1)
        self._beta_col = self.beta.reshape(C, 1)
        # Group-membership ones matrix: A[c, c'] = 1 iff same GroupNorm group.
        gs = C // num_groups
        cidx = jnp.arange(C)
        self.group_mat = (cidx[:, None] // gs == cidx[None, :] // gs
                          ).astype(jnp.float32)                          # (C, C)
        self._fwd = jax.jit(self._forward)

    def _forward(self, x):
        B, C, H, W = x.shape
        HW = H * W
        gs = C // self.num_groups
        x3 = x.reshape(B, C, HW)     # free: channels-first kept end to end (no transposes)

        # ------------- kernel 1: GroupNorm + fused q/k/v (grid over batch) -----------
        norm_qkv = _make_norm_qkv_kernel(1.0 / float(gs * HW), self.eps)
        qkv = pl.pallas_call(
            norm_qkv,
            out_shape=jax.ShapeDtypeStruct((B, 3 * C, HW), jnp.bfloat16),
            grid=(B,),
            in_specs=[
                pl.BlockSpec((1, C, HW), lambda b: (b, 0, 0)),      # x
                pl.BlockSpec((C, C), lambda b: (0, 0)),             # group ones matrix
                pl.BlockSpec((C, 1), lambda b: (0, 0)),             # gamma
                pl.BlockSpec((C, 1), lambda b: (0, 0)),             # beta
                pl.BlockSpec((3 * C, C), lambda b: (0, 0)),         # fused Wqkv (bf16)
                pl.BlockSpec((3 * C, 1), lambda b: (0, 0)),         # fused bias
            ],
            out_specs=pl.BlockSpec((1, 3 * C, HW), lambda b: (b, 0, 0)),
            compiler_params=pltpu.CompilerParams(
                dimension_semantics=("parallel",),
                vmem_limit_bytes=_VMEM_LIMIT_BYTES),
        )(x3, self.group_mat, self._gamma_col, self._beta_col,
          self.w_qkv, self.b_qkv)
        # TODO(synk): for very large HW*C (v7x, 64 MiB VMEM) tile the HW axis here with a
        # two-pass GroupNorm (stats accumulation pass, then normalize+project pass).

        # ---------- kernel 2: attention + proj_out + residual (q-tiled) --------------
        tq = _pick_q_tile(HW, B)
        nq = HW // tq
        out3 = pl.pallas_call(
            _attn_proj_kernel,
            out_shape=jax.ShapeDtypeStruct((B, C, HW), jnp.float32),
            grid=(B, nq),
            in_specs=[
                pl.BlockSpec((1, C, tq), lambda b, i: (b, 0, i)),   # q tile (channel block 0)
                pl.BlockSpec((1, C, HW), lambda b, i: (b, 1, 0)),   # k (VMEM-resident)
                pl.BlockSpec((1, C, HW), lambda b, i: (b, 2, 0)),   # v (VMEM-resident)
                pl.BlockSpec((C, C), lambda b, i: (0, 0)),          # w_proj (bf16)
                pl.BlockSpec((C, 1), lambda b, i: (0, 0)),          # b_proj
                pl.BlockSpec((1, C, tq), lambda b, i: (b, 0, i)),   # residual x tile
            ],
            out_specs=pl.BlockSpec((1, C, tq), lambda b, i: (b, 0, i)),
            compiler_params=pltpu.CompilerParams(
                dimension_semantics=("parallel", "parallel"),
                vmem_limit_bytes=_VMEM_LIMIT_BYTES),
        )(qkv, qkv, qkv, self.w_proj, self._b_proj_col, x3)
        # TODO(synk): single-buffer the resident K/V/W blocks (pl.Buffered(1)) and switch
        # to flash-style online-softmax K tiling once HW*C pushes the double-buffered
        # residents past v7x's 64 MiB VMEM.
        # TODO(synk): when 6*HW*C bf16 fits VMEM, fuse kernels 1+2 into one per-batch
        # pallas_call (qkv kept in VMEM scratch) to remove the qkv HBM round trip.

        return out3.reshape(B, C, H, W)

    def __call__(self, x):
        return self._fwd(x)


# ------------------------------ Reference (f32) --------------------------------

def _ref_attnblock(x, blk):
    B, C, H, W = x.shape
    NG, eps = blk.num_groups, blk.eps
    gs = C // NG
    hi = jax.lax.Precision.HIGHEST
    xg = x.reshape(B, NG, gs * H * W)
    mean = xg.mean(axis=-1, keepdims=True)
    var = xg.var(axis=-1, keepdims=True)
    xn = ((xg - mean) / jnp.sqrt(var + eps)).reshape(B, C, H, W)
    xn = xn * blk.gamma[None, :, None, None] + blk.beta[None, :, None, None]

    def conv1x1(t, w, b):
        return jnp.einsum('oc,bchw->bohw', w, t, precision=hi) + b[None, :, None, None]

    q = conv1x1(xn, blk.wq, blk.bq)
    k = conv1x1(xn, blk.wk, blk.bk)
    v = conv1x1(xn, blk.wv, blk.bv)
    qf = q.reshape(B, C, H * W).transpose(0, 2, 1)                 # (B, HW, C)
    kf = k.reshape(B, C, H * W)                                    # (B, C, HW)
    w_ = jnp.einsum('bic,bcj->bij', qf, kf, precision=hi) * (float(C) ** -0.5)
    w_ = jax.nn.softmax(w_, axis=2)
    vf = v.reshape(B, C, H * W)
    h_ = jnp.einsum('bcj,bij->bci', vf, w_, precision=hi).reshape(B, C, H, W)
    h_ = conv1x1(h_, blk.wp, blk.bp)
    return x + h_


# ----------------------------------- Main ---------------------------------------

if __name__ == "__main__":
    key = jax.random.PRNGKey(0)
    kx, kp = jax.random.split(key)
    # GroupNorm(num_groups=32) requires channels % 32 == 0 -> use C=64.
    B, C, H, W = 2, 64, 16, 16
    x = jax.random.normal(kx, (B, C, H, W), dtype=jnp.float32)

    blk = AttnBlockPallas(in_channels=C, key=kp)
    y = jax.block_until_ready(blk(x))
    y_ref = _ref_attnblock(x, blk)

    assert y.shape == (B, C, H, W)
    max_err = float(jnp.max(jnp.abs(y - y_ref)))
    # bf16 MXU operands (f32 accumulation, f32 softmax) -> ~1e-2-level diffs vs the
    # all-f32 reference are expected; tolerance is set accordingly.
    assert jnp.allclose(y, y_ref, atol=3e-2, rtol=3e-2), f"max_err={max_err}"
    print("KERNEL_OK")
</pallas_src>

<mosaic_0001>
module attributes {stable_mosaic.version = 11 : i64} {
  func.func @kernel(%arg0: i32, %arg1: memref<1x64x256xf32, #tpu.memory_space<vmem>>, %arg2: memref<64x64xf32, #tpu.memory_space<vmem>>, %arg3: memref<64x1xf32, #tpu.memory_space<vmem>>, %arg4: memref<64x1xf32, #tpu.memory_space<vmem>>, %arg5: memref<192x64xbf16, #tpu.memory_space<vmem>>, %arg6: memref<192x1xf32, #tpu.memory_space<vmem>>, %arg7: memref<1x192x256xbf16, #tpu.memory_space<vmem>>) attributes {dimension_semantics = [#tpu.dimension_semantics<parallel>], iteration_bounds = array<i64: 2>, scalar_prefetch = 0 : i64, scratch_operands = 0 : i64, tpu.core_type = #tpu.core_type<tc>, window_params = [{transform_indices = @transform_0, window_bounds = array<i64: 1, 64, 256>}, {pipeline_mode = #tpu.pipeline_mode<synchronous>, transform_indices = @transform_1, window_bounds = array<i64: 64, 64>}, {pipeline_mode = #tpu.pipeline_mode<synchronous>, transform_indices = @transform_2, window_bounds = array<i64: 64, 1>}, {pipeline_mode = #tpu.pipeline_mode<synchronous>, transform_indices = @transform_3, window_bounds = array<i64: 64, 1>}, {pipeline_mode = #tpu.pipeline_mode<synchronous>, transform_indices = @transform_4, window_bounds = array<i64: 192, 64>}, {pipeline_mode = #tpu.pipeline_mode<synchronous>, transform_indices = @transform_5, window_bounds = array<i64: 192, 1>}, {transform_indices = @transform_6, window_bounds = array<i64: 1, 192, 256>}]} {
    %c0 = arith.constant 0 : index
    %c0_0 = arith.constant 0 : index
    %c0_1 = arith.constant 0 : index
    %0 = vector.load %arg1[%c0, %c0_0, %c0_1] : memref<1x64x256xf32, #tpu.memory_space<vmem>>, vector<1x64x256xf32>
    %1 = vector.shape_cast %0 : vector<1x64x256xf32> to vector<64x256xf32>
    %cst = arith.constant dense<0.000000e+00> : vector<64xf32>
    %2 = vector.multi_reduction <add>, %1, %cst [1] : vector<64x256xf32> to vector<64xf32>
    %3 = vector.shape_cast %2 : vector<64xf32> to vector<64x1xf32>
    %c0_2 = arith.constant 0 : index
    %c0_3 = arith.constant 0 : index
    %4 = vector.load %arg2[%c0_2, %c0_3] : memref<64x64xf32, #tpu.memory_space<vmem>>, vector<64x64xf32>
    %cst_4 = arith.constant dense<0.000000e+00> : vector<64x1xf32>
    %5 = tpu.matmul %4, %3, %cst_4 {dimension_numbers = #tpu.dot_dimension_numbers<[1], [0], [0], [1], [0, 0, 1, 1], [], []>} : vector<64x64xf32>, vector<64x1xf32>, vector<64x1xf32> -> vector<64x1xf32>
    %cst_5 = arith.constant 0.001953125 : f32
    %6 = vector.broadcast %cst_5 : f32 to vector<64x1xf32>
    %7 = arith.mulf %5, %6 : vector<64x1xf32>
    %8 = vector.broadcast %7 : vector<64x1xf32> to vector<64x256xf32>
    %9 = arith.subf %1, %8 : vector<64x256xf32>
    %10 = arith.mulf %9, %9 : vector<64x256xf32>
    %cst_6 = arith.constant dense<0.000000e+00> : vector<64xf32>
    %11 = vector.multi_reduction <add>, %10, %cst_6 [1] : vector<64x256xf32> to vector<64xf32>
    %12 = vector.shape_cast %11 : vector<64xf32> to vector<64x1xf32>
    %c0_7 = arith.constant 0 : index
    %c0_8 = arith.constant 0 : index
    %13 = vector.load %arg2[%c0_7, %c0_8] : memref<64x64xf32, #tpu.memory_space<vmem>>, vector<64x64xf32>
    %cst_9 = arith.constant dense<0.000000e+00> : vector<64x1xf32>
    %14 = tpu.matmul %13, %12, %cst_9 {dimension_numbers = #tpu.dot_dimension_numbers<[1], [0], [0], [1], [0, 0, 1, 1], [], []>} : vector<64x64xf32>, vector<64x1xf32>, vector<64x1xf32> -> vector<64x1xf32>
    %cst_10 = arith.constant 0.001953125 : f32
    %15 = vector.broadcast %cst_10 : f32 to vector<64x1xf32>
    %16 = arith.mulf %14, %15 : vector<64x1xf32>
    %c0_11 = arith.constant 0 : index
    %c0_12 = arith.constant 0 : index
    %17 = vector.load %arg3[%c0_11, %c0_12] : memref<64x1xf32, #tpu.memory_space<vmem>>, vector<64x1xf32>
    %cst_13 = arith.constant 9.99999997E-7 : f32
    %18 = vector.broadcast %cst_13 : f32 to vector<64x1xf32>
    %19 = arith.addf %16, %18 : vector<64x1xf32>
    %20 = math.rsqrt %19 : vector<64x1xf32>
    %21 = arith.mulf %17, %20 : vector<64x1xf32>
    %22 = vector.broadcast %21 : vector<64x1xf32> to vector<64x256xf32>
    %23 = arith.mulf %9, %22 : vector<64x256xf32>
    %c0_14 = arith.constant 0 : index
    %c0_15 = arith.constant 0 : index
    %24 = vector.load %arg4[%c0_14, %c0_15] : memref<64x1xf32, #tpu.memory_space<vmem>>, vector<64x1xf32>
    %25 = vector.broadcast %24 : vector<64x1xf32> to vector<64x256xf32>
    %26 = arith.addf %23, %25 : vector<64x256xf32>
    %27 = arith.truncf %26 : vector<64x256xf32> to vector<64x256xbf16>
    %c0_16 = arith.constant 0 : index
    %c0_17 = arith.constant 0 : index
    %28 = vector.load %arg5[%c0_16, %c0_17] : memref<192x64xbf16, #tpu.memory_space<vmem>>, vector<192x64xbf16>
    %cst_18 = arith.constant dense<0.000000e+00> : vector<192x256xf32>
    %29 = tpu.matmul %28, %27, %cst_18 {dimension_numbers = #tpu.dot_dimension_numbers<[1], [0], [0], [1], [0, 0, 1, 1], [], []>} : vector<192x64xbf16>, vector<64x256xbf16>, vector<192x256xf32> -> vector<192x256xf32>
    %c0_19 = arith.constant 0 : index
    %c0_20 = arith.constant 0 : index
    %30 = vector.load %arg6[%c0_19, %c0_20] : memref<192x1xf32, #tpu.memory_space<vmem>>, vector<192x1xf32>
    %31 = vector.broadcast %30 : vector<192x1xf32> to vector<192x256xf32>
    %32 = arith.addf %29, %31 : vector<192x256xf32>
    %33 = arith.truncf %32 : vector<192x256xf32> to vector<192x256xbf16>
    %c0_21 = arith.constant 0 : index
    %c0_22 = arith.constant 0 : index
    %c0_23 = arith.constant 0 : index
    %34 = vector.load %arg7[%c0_21, %c0_22, %c0_23] : memref<1x192x256xbf16, #tpu.memory_space<vmem>>, vector<1x192x256xbf16>
    %35 = vector.shape_cast %34 : vector<1x192x256xbf16> to vector<192x256xbf16>
    %36 = vector.shape_cast %33 : vector<192x256xbf16> to vector<1x192x256xbf16>
    tpu.vector_store %arg7[%c0_21, %c0_22, %c0_23], %36 {strides = array<i32>} : memref<1x192x256xbf16, #tpu.memory_space<vmem>>, vector<1x192x256xbf16>,
    return
  }
  func.func @transform_0(%arg0: i32) -> (i32, i32, i32) {
    %c0_i32 = arith.constant 0 : i32
    %c0_i32_0 = arith.constant 0 : i32
    %c0_i32_1 = arith.constant 0 : i32
    return %arg0, %c0_i32, %c0_i32_0 : i32, i32, i32
  }
  func.func @transform_1(%arg0: i32) -> (i32, i32) {
    %c0_i32 = arith.constant 0 : i32
    %c0_i32_0 = arith.constant 0 : i32
    %c0_i32_1 = arith.constant 0 : i32
    return %c0_i32, %c0_i32_0 : i32, i32
  }
  func.func @transform_2(%arg0: i32) -> (i32, i32) {
    %c0_i32 = arith.constant 0 : i32
    %c0_i32_0 = arith.constant 0 : i32
    %c0_i32_1 = arith.constant 0 : i32
    return %c0_i32, %c0_i32_0 : i32, i32
  }
  func.func @transform_3(%arg0: i32) -> (i32, i32) {
    %c0_i32 = arith.constant 0 : i32
    %c0_i32_0 = arith.constant 0 : i32
    %c0_i32_1 = arith.constant 0 : i32
    return %c0_i32, %c0_i32_0 : i32, i32
  }
  func.func @transform_4(%arg0: i32) -> (i32, i32) {
    %c0_i32 = arith.constant 0 : i32
    %c0_i32_0 = arith.constant 0 : i32
    %c0_i32_1 = arith.constant 0 : i32
    return %c0_i32, %c0_i32_0 : i32, i32
  }
  func.func @transform_5(%arg0: i32) -> (i32, i32) {
    %c0_i32 = arith.constant 0 : i32
    %c0_i32_0 = arith.constant 0 : i32
    %c0_i32_1 = arith.constant 0 : i32
    return %c0_i32, %c0_i32_0 : i32, i32
  }
  func.func @transform_6(%arg0: i32) -> (i32, i32, i32) {
    %c0_i32 = arith.constant 0 : i32
    %c0_i32_0 = arith.constant 0 : i32
    %c0_i32_1 = arith.constant 0 : i32
    return %arg0, %c0_i32, %c0_i32_0 : i32, i32, i32
  }
}

module attributes {stable_mosaic.version = 11 : i64} {
  func.func @_attn_proj_kernel(%arg0: i32, %arg1: i32, %arg2: memref<1x64x256xbf16, #tpu.memory_space<vmem>>, %arg3: memref<1x64x256xbf16, #tpu.memory_space<vmem>>, %arg4: memref<1x64x256xbf16, #tpu.memory_space<vmem>>, %arg5: memref<64x64xbf16, #tpu.memory_space<vmem>>, %arg6: memref<64x1xf32, #tpu.memory_space<vmem>>, %arg7: memref<1x64x256xf32, #tpu.memory_space<vmem>>, %arg8: memref<1x64x256xf32, #tpu.memory_space<vmem>>) attributes {dimension_semantics = [#tpu.dimension_semantics<parallel>, #tpu.dimension_semantics<parallel>], iteration_bounds = array<i64: 2, 1>, scalar_prefetch = 0 : i64, scratch_operands = 0 : i64, tpu.core_type = #tpu.core_type<tc>, window_params = [{transform_indices = @transform_0, window_bounds = array<i64: 1, 64, 256>}, {transform_indices = @transform_1, window_bounds = array<i64: 1, 64, 256>}, {transform_indices = @transform_2, window_bounds = array<i64: 1, 64, 256>}, {pipeline_mode = #tpu.pipeline_mode<synchronous>, transform_indices = @transform_3, window_bounds = array<i64: 64, 64>}, {pipeline_mode = #tpu.pipeline_mode<synchronous>, transform_indices = @transform_4, window_bounds = array<i64: 64, 1>}, {transform_indices = @transform_5, window_bounds = array<i64: 1, 64, 256>}, {transform_indices = @transform_6, window_bounds = array<i64: 1, 64, 256>}]} {
    %c0 = arith.constant 0 : index
    %c0_0 = arith.constant 0 : index
    %c0_1 = arith.constant 0 : index
    %0 = vector.load %arg2[%c0, %c0_0, %c0_1] : memref<1x64x256xbf16, #tpu.memory_space<vmem>>, vector<1x64x256xbf16>
    %1 = vector.shape_cast %0 : vector<1x64x256xbf16> to vector<64x256xbf16>
    %c0_2 = arith.constant 0 : index
    %c0_3 = arith.constant 0 : index
    %c0_4 = arith.constant 0 : index
    %2 = vector.load %arg3[%c0_2, %c0_3, %c0_4] : memref<1x64x256xbf16, #tpu.memory_space<vmem>>, vector<1x64x256xbf16>
    %3 = vector.shape_cast %2 : vector<1x64x256xbf16> to vector<64x256xbf16>
    %c0_5 = arith.constant 0 : index
    %c0_6 = arith.constant 0 : index
    %c0_7 = arith.constant 0 : index
    %4 = vector.load %arg4[%c0_5, %c0_6, %c0_7] : memref<1x64x256xbf16, #tpu.memory_space<vmem>>, vector<1x64x256xbf16>
    %5 = vector.shape_cast %4 : vector<1x64x256xbf16> to vector<64x256xbf16>
    %6 = tpu.transpose %1, [1, 0] : vector<64x256xbf16> -> vector<256x64xbf16>
    %cst = arith.constant dense<0.000000e+00> : vector<256x256xf32>
    %7 = tpu.matmul %6, %3, %cst {dimension_numbers = #tpu.dot_dimension_numbers<[1], [0], [0], [1], [0, 0, 1, 1], [], []>} : vector<256x64xbf16>, vector<64x256xbf16>, vector<256x256xf32> -> vector<256x256xf32>
    %cst_8 = arith.constant dense<0xFF800000> : vector<256xf32>
    %8 = vector.multi_reduction <maximumf>, %7, %cst_8 [1] : vector<256x256xf32> to vector<256xf32>
    %9 = vector.shape_cast %8 : vector<256xf32> to vector<256x1xf32>
    %10 = vector.broadcast %9 : vector<256x1xf32> to vector<256x256xf32>
    %11 = arith.subf %7, %10 : vector<256x256xf32>
    %12 = math.exp %11 : vector<256x256xf32>
    %cst_9 = arith.constant dense<0.000000e+00> : vector<256xf32>
    %13 = vector.multi_reduction <add>, %12, %cst_9 [1] : vector<256x256xf32> to vector<256xf32>
    %14 = vector.shape_cast %13 : vector<256xf32> to vector<256x1xf32>
    %15 = tpu.reciprocal %14 {approx = true} : vector<256x1xf32> -> vector<256x1xf32>
    %16 = vector.broadcast %15 : vector<256x1xf32> to vector<256x256xf32>
    %17 = arith.mulf %12, %16 : vector<256x256xf32>
    %18 = arith.truncf %17 : vector<256x256xf32> to vector<256x256xbf16>
    %cst_10 = arith.constant dense<0.000000e+00> : vector<64x256xf32>
    %19 = tpu.matmul %5, %18, %cst_10 {dimension_numbers = #tpu.dot_dimension_numbers<[1], [1], [0], [0], [0, 0, 1, 0], [], []>} : vector<64x256xbf16>, vector<256x256xbf16>, vector<64x256xf32> -> vector<64x256xf32>
    %c0_11 = arith.constant 0 : index
    %c0_12 = arith.constant 0 : index
    %20 = vector.load %arg5[%c0_11, %c0_12] : memref<64x64xbf16, #tpu.memory_space<vmem>>, vector<64x64xbf16>
    %21 = arith.truncf %19 : vector<64x256xf32> to vector<64x256xbf16>
    %cst_13 = arith.constant dense<0.000000e+00> : vector<64x256xf32>
    %22 = tpu.matmul %20, %21, %cst_13 {dimension_numbers = #tpu.dot_dimension_numbers<[1], [0], [0], [1], [0, 0, 1, 1], [], []>} : vector<64x64xbf16>, vector<64x256xbf16>, vector<64x256xf32> -> vector<64x256xf32>
    %c0_14 = arith.constant 0 : index
    %c0_15 = arith.constant 0 : index
    %23 = vector.load %arg6[%c0_14, %c0_15] : memref<64x1xf32, #tpu.memory_space<vmem>>, vector<64x1xf32>
    %24 = vector.broadcast %23 : vector<64x1xf32> to vector<64x256xf32>
    %25 = arith.addf %22, %24 : vector<64x256xf32>
    %c0_16 = arith.constant 0 : index
    %c0_17 = arith.constant 0 : index
    %c0_18 = arith.constant 0 : index
    %26 = vector.load %arg7[%c0_16, %c0_17, %c0_18] : memref<1x64x256xf32, #tpu.memory_space<vmem>>, vector<1x64x256xf32>
    %27 = vector.shape_cast %26 : vector<1x64x256xf32> to vector<64x256xf32>
    %28 = arith.addf %25, %27 : vector<64x256xf32>
    %c0_19 = arith.constant 0 : index
    %c0_20 = arith.constant 0 : index
    %c0_21 = arith.constant 0 : index
    %29 = vector.load %arg8[%c0_19, %c0_20, %c0_21] : memref<1x64x256xf32, #tpu.memory_space<vmem>>, vector<1x64x256xf32>
    %30 = vector.shape_cast %29 : vector<1x64x256xf32> to vector<64x256xf32>
    %31 = vector.shape_cast %28 : vector<64x256xf32> to vector<1x64x256xf32>
    tpu.vector_store %arg8[%c0_19, %c0_20, %c0_21], %31 {strides = array<i32>} : memref<1x64x256xf32, #tpu.memory_space<vmem>>, vector<1x64x256xf32>,
    return
  }
  func.func @transform_0(%arg0: i32, %arg1: i32) -> (i32, i32, i32) {
    %c0_i32 = arith.constant 0 : i32
    %c0_i32_0 = arith.constant 0 : i32
    return %arg0, %c0_i32, %arg1 : i32, i32, i32
  }
  func.func @transform_1(%arg0: i32, %arg1: i32) -> (i32, i32, i32) {
    %c1_i32 = arith.constant 1 : i32
    %c0_i32 = arith.constant 0 : i32
    %c0_i32_0 = arith.constant 0 : i32
    return %arg0, %c1_i32, %c0_i32 : i32, i32, i32
  }
  func.func @transform_2(%arg0: i32, %arg1: i32) -> (i32, i32, i32) {
    %c2_i32 = arith.constant 2 : i32
    %c0_i32 = arith.constant 0 : i32
    %c0_i32_0 = arith.constant 0 : i32
    return %arg0, %c2_i32, %c0_i32 : i32, i32, i32
  }
  func.func @transform_3(%arg0: i32, %arg1: i32) -> (i32, i32) {
    %c0_i32 = arith.constant 0 : i32
    %c0_i32_0 = arith.constant 0 : i32
    %c0_i32_1 = arith.constant 0 : i32
    return %c0_i32, %c0_i32_0 : i32, i32
  }
  func.func @transform_4(%arg0: i32, %arg1: i32) -> (i32, i32) {
    %c0_i32 = arith.constant 0 : i32
    %c0_i32_0 = arith.constant 0 : i32
    %c0_i32_1 = arith.constant 0 : i32
    return %c0_i32, %c0_i32_0 : i32, i32
  }
  func.func @transform_5(%arg0: i32, %arg1: i32) -> (i32, i32, i32) {
    %c0_i32 = arith.constant 0 : i32
    %c0_i32_0 = arith.constant 0 : i32
    return %arg0, %c0_i32, %arg1 : i32, i32, i32
  }
  func.func @transform_6(%arg0: i32, %arg1: i32) -> (i32, i32, i32) {
    %c0_i32 = arith.constant 0 : i32
    %c0_i32_0 = arith.constant 0 : i32
    return %arg0, %c0_i32, %arg1 : i32, i32, i32
  }
}

</mosaic_0001>

<llo_original>
// kernel: _forward.2
$region0: #{_forward.2}
  #allocation0 [shape = 'u32[]', space=smem, size = 0x4, offset = 0x4, fixed_abs, tag = 'smem constant byte address 0x4 - core index']
  #allocation1 [shape = 'u32[144,128]{1,0:T(1,128)}', space=vmem, size = 0x12000, scoped, tag = 'internal scratch']
  %s0 = inlined_call_operand.vmem [shape: f32[2,64,256], index: 0, kind: input, shape index: {}]
  %s1 = inlined_call_operand.vmem [shape: f32[64,64], index: 1, kind: input, shape index: {}]
  %s2 = inlined_call_operand.vmem [shape: f32[64,1], index: 2, kind: input, shape index: {}]
  %s3 = inlined_call_operand.vmem [shape: f32[64,1], index: 3, kind: input, shape index: {}]
  %s4 = inlined_call_operand.vmem [shape: bf16[192,64], index: 4, kind: input, shape index: {}]
  %s5 = inlined_call_operand.vmem [shape: f32[192,1], index: 5, kind: input, shape index: {}]
  %s6 = inlined_call_operand.vmem [shape: bf16[2,192,256], index: 6, kind: output, shape index: {}]
  %s7 = sld [smem:[#allocation0]]
  $region57: #{_forward.2} parent=0
    _
  %s9 = ssub.s32 1, %s7
  %s10 = scalar_select 0, %s9, %s7
  loop: start=0, step=1, limit=4
  $region2: #{_forward.2} parent=0 // loop_pre_header
    _
  $region3: #{_forward.2} parent=0 // loop_header
    %s12 = sphi 0, %s16
    %p13 = scmp.ge.s32.totalorder %s12, 4
    %s22 = sphi 0, %s24
    %s25 = sphi 0, %s22
    %s26 = sphi 0, %s25
    %s42 = sphi 0, %s26
    %s46 = sphi 0, %s46
    %s48 = sphi 0, %s46
    %s49 = sphi 0, %s48
    %s63 = sphi 0, %s49
    %s67 = sphi 0, %s67
    %s69 = sphi 0, %s67
    %s70 = sphi 0, %s69
    %s84 = sphi 0, %s70
    %s88 = sphi 0, %s88
    %s90 = sphi 0, %s88
    %s91 = sphi 0, %s90
    %s105 = sphi 0, %s91
    %s109 = sphi 0, %s109
    %s111 = sphi 0, %s109
    %s112 = sphi 0, %s111
    %s126 = sphi 0, %s112
    %s130 = sphi 0, %s130
    %s132 = sphi 0, %s130
    %s133 = sphi 0, %s132
    %s147 = sphi 0, %s133
    %s153 = sphi 0, %s155
    %s156 = sphi 0, %s153
    %s157 = sphi 0, %s156
    %s173 = sphi 0, %s157
  $region4: #{_forward.2} parent=0 // loop_header_branch
    %15 = sbr.rel (%p13) target = $region8
  $region5: #{_forward.2} parent=0 // loop_body
    %s17 = ssub.s32 %s12, 1
    %s18 = ssub.s32 %s12, 2
    %s19 = sadd.s32 %s12, 1
    %s20 = ssub.s32 %s12, %s19
    %p21 = scmp.eq.s32.totalorder %s20, 0
    %s23 = sadd.s32 %s22, 1
    %s24 = scalar_select %p21, %s22, %s23
    %p27 = pneg %p21
    %p28 = scmp.eq.s32.totalorder %s12, 1
    %p29 = por %p27, %p28
    %p30 = scmp.ne.s32.totalorder %s22, %s25
    %p31 = scmp.eq.s32.totalorder %s12, 0
    %p32 = por %p30, %p31
    %p33 = scmp.ne.s32.totalorder %s22, %s25
    %p34 = scmp.eq.s32.totalorder %s17, 1
    %p35 = por %p33, %p34
    %p36 = scmp.ne.s32.totalorder %s25, %s26
    %p37 = scmp.eq.s32.totalorder %s17, 0
    %p38 = por %p36, %p37
    %p39 = scmp.ne.s32.totalorder %s25, %s26
    %p40 = scmp.eq.s32.totalorder %s18, 1
    %p41 = por %p39, %p40
    %p43 = scmp.ne.s32.totalorder %s26, %s42
    %p44 = scmp.eq.s32.totalorder %s18, 0
    %p45 = por %p43, %p44
    %s47 = sadd.s32 %s46, 1
    %p50 = scmp.eq.s32.totalorder %s12, 1
    %p51 = scmp.ne.s32.totalorder %s46, %s48
    %p52 = scmp.eq.s32.totalorder %s12, 0
    %p53 = por %p51, %p52
    %p54 = scmp.ne.s32.totalorder %s46, %s48
    %p55 = scmp.eq.s32.totalorder %s17, 1
    %p56 = por %p54, %p55
    %p57 = scmp.ne.s32.totalorder %s48, %s49
    %p58 = scmp.eq.s32.totalorder %s17, 0
    %p59 = por %p57, %p58
    %p60 = scmp.ne.s32.totalorder %s48, %s49
    %p61 = scmp.eq.s32.totalorder %s18, 1
    %p62 = por %p60, %p61
    %p64 = scmp.ne.s32.totalorder %s49, %s63
    %p65 = scmp.eq.s32.totalorder %s18, 0
    %p66 = por %p64, %p65
    %s68 = sadd.s32 %s67, 1
    %p71 = scmp.eq.s32.totalorder %s12, 1
    %p72 = scmp.ne.s32.totalorder %s67, %s69
    %p73 = scmp.eq.s32.totalorder %s12, 0
    %p74 = por %p72, %p73
    %p75 = scmp.ne.s32.totalorder %s67, %s69
    %p76 = scmp.eq.s32.totalorder %s17, 1
    %p77 = por %p75, %p76
    %p78 = scmp.ne.s32.totalorder %s69, %s70
    %p79 = scmp.eq.s32.totalorder %s17, 0
    %p80 = por %p78, %p79
    %p81 = scmp.ne.s32.totalorder %s69, %s70
    %p82 = scmp.eq.s32.totalorder %s18, 1
    %p83 = por %p81, %p82
    %p85 = scmp.ne.s32.totalorder %s70, %s84
    %p86 = scmp.eq.s32.totalorder %s18, 0
    %p87 = por %p85, %p86
    %s89 = sadd.s32 %s88, 1
    %p92 = scmp.eq.s32.totalorder %s12, 1
    %p93 = scmp.ne.s32.totalorder %s88, %s90
    %p94 = scmp.eq.s32.totalorder %s12, 0
    %p95 = por %p93, %p94
    %p96 = scmp.ne.s32.totalorder %s88, %s90
    %p97 = scmp.eq.s32.totalorder %s17, 1
    %p98 = por %p96, %p97
    %p99 = scmp.ne.s32.totalorder %s90, %s91
    %p100 = scmp.eq.s32.totalorder %s17, 0
    %p101 = por %p99, %p100
    %p102 = scmp.ne.s32.totalorder %s90, %s91
    %p103 = scmp.eq.s32.totalorder %s18, 1
    %p104 = por %p102, %p103
    %p106 = scmp.ne.s32.totalorder %s91, %s105
    %p107 = scmp.eq.s32.totalorder %s18, 0
    %p108 = por %p106, %p107
    %s110 = sadd.s32 %s109, 1
    %p113 = scmp.eq.s32.totalorder %s12, 1
    %p114 = scmp.ne.s32.totalorder %s109, %s111
    %p115 = scmp.eq.s32.totalorder %s12, 0
    %p116 = por %p114, %p115
    %p117 = scmp.ne.s32.totalorder %s109, %s111
    %p118 = scmp.eq.s32.totalorder %s17, 1
    %p119 = por %p117, %p118
    %p120 = scmp.ne.s32.totalorder %s111, %s112
    %p121 = scmp.eq.s32.totalorder %s17, 0
    %p122 = por %p120, %p121
    %p123 = scmp.ne.s32.totalorder %s111, %s112
    %p124 = scmp.eq.s32.totalorder %s18, 1
    %p125 = por %p123, %p124
    %p127 = scmp.ne.s32.totalorder %s112, %s126
    %p128 = scmp.eq.s32.totalorder %s18, 0
    %p129 = por %p127, %p128
    %s131 = sadd.s32 %s130, 1
    %p134 = scmp.eq.s32.totalorder %s12, 1
    %p135 = scmp.ne.s32.totalorder %s130, %s132
    %p136 = scmp.eq.s32.totalorder %s12, 0
    %p137 = por %p135, %p136
    %p138 = scmp.ne.s32.totalorder %s130, %s132
    %p139 = scmp.eq.s32.totalorder %s17, 1
    %p140 = por %p138, %p139
    %p141 = scmp.ne.s32.totalorder %s132, %s133
    %p142 = scmp.eq.s32.totalorder %s17, 0
    %p143 = por %p141, %p142
    %p144 = scmp.ne.s32.totalorder %s132, %s133
    %p145 = scmp.eq.s32.totalorder %s18, 1
    %p146 = por %p144, %p145
    %p148 = scmp.ne.s32.totalorder %s133, %s147
    %p149 = scmp.eq.s32.totalorder %s18, 0
    %p150 = por %p148, %p149
    %s151 = ssub.s32 %s12, %s19
    %p152 = scmp.eq.s32.totalorder %s151, 0
    %s154 = sadd.s32 %s153, 1
    %s155 = scalar_select %p152, %s153, %s154
    %p158 = pneg %p152
    %p159 = scmp.eq.s32.totalorder %s12, 1
    %p160 = por %p158, %p159
    %p161 = scmp.ne.s32.totalorder %s153, %s156
    %p162 = scmp.eq.s32.totalorder %s12, 0
    %p163 = por %p161, %p162
    %p164 = scmp.ne.s32.totalorder %s153, %s156
    %p165 = scmp.eq.s32.totalorder %s17, 1
    %p166 = por %p164, %p165
    %p167 = scmp.ne.s32.totalorder %s156, %s157
    %p168 = scmp.eq.s32.totalorder %s17, 0
    %p169 = por %p167, %p168
    %p170 = scmp.ne.s32.totalorder %s156, %s157
    %p171 = scmp.eq.s32.totalorder %s18, 1
    %p172 = por %p170, %p171
    %p174 = scmp.ne.s32.totalorder %s157, %s173
    %p175 = scmp.eq.s32.totalorder %s18, 0
    %p176 = por %p174, %p175
    %p177 = scmp.le.s32.totalorder 1, %s12
    %p178 = scmp.lt.s32.totalorder %s12, 3
    %p179 = pnand %p177, %p178
    %p180 = pneg %p179
    // Predicated region
    $region9: #{_forward.2} parent=5 // pred_check
      _
    $region10: #{_forward.2} parent=5 // pred_check_branch
      %182 = sbr.rel (%p179) target = $region12
    $region11: #{_forward.2} parent=5 // pred_region
      %s183 = ssub.s32 %s12, 1
      // Predicated region
      $region13: #{_forward.2} parent=11 // pred_check
        %p184 = pneg %p59
      $region14: #{_forward.2} parent=11 // pred_check_branch
        %186 = sbr.rel (%p184) target = $region16
      $region15: #{_forward.2} parent=11 // pred_region
        _
      $region16: #{_forward.2} parent=11 // pred_fallthru
        _
      // Predicated region
      $region17: #{_forward.2} parent=11 // pred_check
        %p187 = pneg %p80
      $region18: #{_forward.2} parent=11 // pred_check_branch
        %189 = sbr.rel (%p187) target = $region20
      $region19: #{_forward.2} parent=11 // pred_region
        _
      $region20: #{_forward.2} parent=11 // pred_fallthru
        _
      // Predicated region
      $region21: #{_forward.2} parent=11 // pred_check
        %p190 = pneg %p101
      $region22: #{_forward.2} parent=11 // pred_check_branch
        %192 = sbr.rel (%p190) target = $region24
      $region23: #{_forward.2} parent=11 // pred_region
        _
      $region24: #{_forward.2} parent=11 // pred_fallthru
        _
      // Predicated region
      $region25: #{_forward.2} parent=11 // pred_check
        %p193 = pneg %p122
      $region26: #{_forward.2} parent=11 // pred_check_branch
        %195 = sbr.rel (%p193) target = $region28
      $region27: #{_forward.2} parent=11 // pred_region
        _
      $region28: #{_forward.2} parent=11 // pred_fallthru
        _
      // Predicated region
      $region29: #{_forward.2} parent=11 // pred_check
        %p196 = pneg %p143
      $region30: #{_forward.2} parent=11 // pred_check_branch
        %198 = sbr.rel (%p196) target = $region32
      $region31: #{_forward.2} parent=11 // pred_region
        _
      $region32: #{_forward.2} parent=11 // pred_fallthru
        _
    $region12: #{_forward.2} parent=5 // pred_fallthru
      _
    %p199 = scmp.lt.s32.totalorder %s12, 2
    // Predicated region
    $region33: #{_forward.2} parent=5 // pred_check
      %p200 = pneg %p199
    $region34: #{_forward.2} parent=5 // pred_check_branch
      %202 = sbr.rel (%p200) target = $region36
    $region35: #{_forward.2} parent=5 // pred_region
      // Predicated region
      $region37: #{_forward.2} parent=35 // pred_check
        %p203 = pneg %p32
      $region38: #{_forward.2} parent=35 // pred_check_branch
        %205 = sbr.rel (%p203) target = $region40
      $region39: #{_forward.2} parent=35 // pred_region
        %p206 = scmp.lt.s32.totalorder %s12, 1
        %s207 = scalar_select %p206, %s12, 1
        %s208 = smul.addr %s207, 16
        %s209 = smul.addr %s208, 8
        %s210 = scalar_lea.vmem %s0, %s209
      $region40: #{_forward.2} parent=35 // pred_fallthru
        _
    $region36: #{_forward.2} parent=5 // pred_fallthru
      _
    %p211 = scmp.le.s32.totalorder 1, %s12
    %p212 = scmp.lt.s32.totalorder %s12, 3
    %p213 = pnand %p211, %p212
    %p214 = pneg %p213
    // Predicated region
    $region41: #{_forward.2} parent=5 // pred_check
      _
    $region42: #{_forward.2} parent=5 // pred_check_branch
      %216 = sbr.rel (%p213) target = $region44
    $region43: #{_forward.2} parent=5 // pred_region
      %s217 = ssub.s32 %s12, 1
      %p218 = scmp.lt.s32.totalorder %s17, 1
      %s219 = scalar_select %p218, %s17, 1
      %s220 = smul.addr %s219, 16
      %s221 = smul.addr %s220, 8
      %s222 = scalar_lea.vmem %s0, %s221
      %p223 = pneg %p38
      %p224 = pneg %p35
      %p225 = pneg %p59
      %p226 = pneg %p56
      %p227 = pneg %p80
      %p228 = pneg %p77
      %p229 = pneg %p101
      %p230 = pneg %p98
      %p231 = pneg %p122
      %p232 = pneg %p119
      %p233 = pneg %p143
      %p234 = pneg %p140
      %p235 = pneg %p169
      %p236 = pneg %p166
      %p237 = scmp.lt.s32.totalorder %s17, 1
      %s238 = scalar_select %p237, %s17, 1
      %s239 = smul.addr %s238, 48
      %s240 = smul.addr %s239, 4
      %s241 = scalar_lea.vmem %s6, %s240
      %p242 = scmp.lt.s32.totalorder %s17, 1
      %s243 = scalar_select %p242, %s17, 1
      %s244 = smul.addr %s243, 16
      %s245 = smul.addr %s244, 8
      %s246 = scalar_lea.vmem %s0, %s245
      %p247 = scmp.lt.s32.totalorder %s17, 1
      %s248 = scalar_select %p247, %s17, 1
      %s249 = smul.addr %s248, 48
      %s250 = smul.addr %s249, 4
      %s251 = scalar_lea.vmem %s6, %s250
      %v253 = vld [vmem:[%s246] sm:$0xff]
      %v254 = vld [vmem:[%s246 + $0x8] sm:$0xff]
      %v255 = vld [vmem:[%s246 + $0x10] sm:$0xff]
      %v256 = vld [vmem:[%s246 + $0x18] sm:$0xff]
      %v257 = vld [vmem:[%s246 + $0x20] sm:$0xff]
      %v258 = vld [vmem:[%s246 + $0x28] sm:$0xff]
      %v259 = vld [vmem:[%s246 + $0x30] sm:$0xff]
      %v260 = vld [vmem:[%s246 + $0x38] sm:$0xff]
      %v261 = vld [vmem:[%s246 + $0x40] sm:$0xff]
      %v262 = vld [vmem:[%s246 + $0x48] sm:$0xff]
      %v263 = vld [vmem:[%s246 + $0x50] sm:$0xff]
      %v264 = vld [vmem:[%s246 + $0x58] sm:$0xff]
      %v265 = vld [vmem:[%s246 + $0x60] sm:$0xff]
      %v266 = vld [vmem:[%s246 + $0x68] sm:$0xff]
      %v267 = vld [vmem:[%s246 + $0x70] sm:$0xff]
      %v268 = vld [vmem:[%s246 + $0x78] sm:$0xff]
      %v269 = vadd.f32 %v253, %v254
      %270 = vadd.xlane.f32.xlu0 %v269
      %v271 = vpop.xlane.xlu0 %270
      %v272 = vadd.f32 %v255, %v256
      %273 = vadd.xlane.f32.xlu0 %v272
      %v274 = vpop.xlane.xlu0 %273
      %v275 = vadd.f32 %v257, %v258
      %276 = vadd.xlane.f32.xlu0 %v275
      %v277 = vpop.xlane.xlu0 %276
      %v278 = vadd.f32 %v259, %v260
      %279 = vadd.xlane.f32.xlu0 %v278
      %v280 = vpop.xlane.xlu0 %279
      %v281 = vadd.f32 %v261, %v262
      %282 = vadd.xlane.f32.xlu0 %v281
      %v283 = vpop.xlane.xlu0 %282
      %v284 = vadd.f32 %v263, %v264
      %285 = vadd.xlane.f32.xlu0 %v284
      %v286 = vpop.xlane.xlu0 %285
      %v287 = vadd.f32 %v265, %v266
      %288 = vadd.xlane.f32.xlu0 %v287
      %v289 = vpop.xlane.xlu0 %288
      %v290 = vadd.f32 %v267, %v268
      %291 = vadd.xlane.f32.xlu0 %v290
      %v292 = vpop.xlane.xlu0 %291
      %v293 = vld [vmem:[%s1] sm:$0xff]
      %v294 = vld [vmem:[%s1 + $0x8] sm:$0xff]
      %v295 = vld [vmem:[%s1 + $0x10] sm:$0xff]
      %v296 = vld [vmem:[%s1 + $0x18] sm:$0xff]
      %v297 = vld [vmem:[%s1 + $0x20] sm:$0xff]
      %v298 = vld [vmem:[%s1 + $0x28] sm:$0xff]
      %v299 = vld [vmem:[%s1 + $0x30] sm:$0xff]
      %v300 = vld [vmem:[%s1 + $0x38] sm:$0xff]
      %vm301 = vcmask 523264
      %v303 = vsel %vm301, %v293, 0
      %v306 = vsel %vm301, %v294, 0
      %v309 = vsel %vm301, %v295, 0
      %v312 = vsel %vm301, %v296, 0
      %v315 = vsel %vm301, %v297, 0
      %v318 = vsel %vm301, %v298, 0
      %v321 = vsel %vm301, %v299, 0
      %v324 = vsel %vm301, %v300, 0
      %326 = vmatprep.subr.mxu0 0.0
      %327 = vmatpush1.msra.mxu0 0.0
      %328 = vmatprep.subr.mxu0 0.0
      %329 = vmatpush1.msra.mxu0 0.0
      %330 = vmatprep.subr.mxu0 0.0
      %331 = vmatpush1.msra.mxu0 0.0
      %332 = vmatprep.subr.mxu0 0.0
      %333 = vmatpush1.msra.mxu0 0.0
      %334 = vmatprep.subr.mxu0 0.0
      %335 = vmatpush1.msra.mxu0 0.0
      %336 = vmatprep.subr.mxu0 0.0
      %337 = vmatpush1.msra.mxu0 0.0
      %338 = vmatprep.subr.mxu0 0.0
      %339 = vmatpush1.msra.mxu0 0.0
      %340 = vmatprep.subr.mxu0 0.0
      %341 = vmatpush1.msra.mxu0 0.0
      %342 = vmatprep.subr.mxu0 0.0
      %343 = vmatpush1.msra.mxu0 %v292
      %344 = vmatprep.subr.mxu0 0.0
      %345 = vmatpush1.msra.mxu0 %v289
      %346 = vmatprep.subr.mxu0 0.0
      %347 = vmatpush1.msra.mxu0 %v286
      %348 = vmatprep.subr.mxu0 0.0
      %349 = vmatpush1.msra.mxu0 %v283
      %350 = vmatprep.subr.mxu0 0.0
      %351 = vmatpush1.msra.mxu0 %v280
      %352 = vmatprep.subr.mxu0 0.0
      %353 = vmatpush1.msra.mxu0 %v277
      %354 = vmatprep.subr.mxu0 0.0
      %355 = vmatpush1.msra.mxu0 %v274
      %356 = vmatprep.subr.mxu0 0.0
      %357 = vmatpush1.msra.mxu0 %v271
      %358 = vmatprep.subr.mxu0 0.0
      %359 = vmatpush2.msra.mxu0 0.0
      %360 = vmatprep.subr.mxu0 0.0
      %361 = vmatpush2.msra.mxu0 0.0
      %362 = vmatprep.subr.mxu0 0.0
      %363 = vmatpush2.msra.mxu0 0.0
      %364 = vmatprep.subr.mxu0 0.0
      %365 = vmatpush2.msra.mxu0 0.0
      %366 = vmatprep.subr.mxu0 0.0
      %367 = vmatpush2.msra.mxu0 0.0
      %368 = vmatprep.subr.mxu0 0.0
      %369 = vmatpush2.msra.mxu0 0.0
      %370 = vmatprep.subr.mxu0 0.0
      %371 = vmatpush2.msra.mxu0 0.0
      %372 = vmatprep.subr.mxu0 0.0
      %373 = vmatpush2.msra.mxu0 0.0
      %374 = vmatprep.subr.mxu0 0.0
      %375 = vmatpush2.msra.mxu0 0.0
      %376 = vmatprep.subr.mxu0 0.0
      %377 = vmatpush2.msra.mxu0 0.0
      %378 = vmatprep.subr.mxu0 0.0
      %379 = vmatpush2.msra.mxu0 0.0
      %380 = vmatprep.subr.mxu0 0.0
      %381 = vmatpush2.msra.mxu0 0.0
      %382 = vmatprep.subr.mxu0 0.0
      %383 = vmatpush2.msra.mxu0 0.0
      %384 = vmatprep.subr.mxu0 0.0
      %385 = vmatpush2.msra.mxu0 0.0
      %386 = vmatprep.subr.mxu0 0.0
      %387 = vmatpush2.msra.mxu0 0.0
      %388 = vmatprep.subr.mxu0 0.0
      %389 = vmatpush2.msra.mxu0 0.0
      %390 = vmatprep.mubr.f32.mxu0 0.0
      %391 = vmatmul.mubr.f32.gmra.mxu0 %v303
      %v392 = vpop.f32.mrf.mxu0
      %v393 = vadd.f32 0.0, %v392
      %v394 = vpop.f32.mrf.mxu0
      %395 = vmatprep.mubr.f32.mxu0 0.0
      %396 = vmatmul.mubr.f32.gmra.mxu0 %v306
      %v397 = vpop.f32.mrf.mxu0
      %v398 = vadd.f32 0.0, %v397
      %v399 = vpop.f32.mrf.mxu0
      %400 = vmatprep.mubr.f32.mxu0 0.0
      %401 = vmatmul.mubr.f32.gmra.mxu0 %v309
      %v402 = vpop.f32.mrf.mxu0
      %v403 = vadd.f32 0.0, %v402
      %v404 = vpop.f32.mrf.mxu0
      %405 = vmatprep.mubr.f32.mxu0 0.0
      %406 = vmatmul.mubr.f32.gmra.mxu0 %v312
      %v407 = vpop.f32.mrf.mxu0
      %v408 = vadd.f32 0.0, %v407
      %v409 = vpop.f32.mrf.mxu0
      %410 = vmatprep.mubr.f32.mxu0 0.0
      %411 = vmatmul.mubr.f32.gmra.mxu0 %v315
      %v412 = vpop.f32.mrf.mxu0
      %v413 = vadd.f32 0.0, %v412
      %v414 = vpop.f32.mrf.mxu0
      %415 = vmatprep.mubr.f32.mxu0 0.0
      %416 = vmatmul.mubr.f32.gmra.mxu0 %v318
      %v417 = vpop.f32.mrf.mxu0
      %v418 = vadd.f32 0.0, %v417
      %v419 = vpop.f32.mrf.mxu0
      %420 = vmatprep.mubr.f32.mxu0 0.0
      %421 = vmatmul.mubr.f32.gmra.mxu0 %v321
      %v422 = vpop.f32.mrf.mxu0
      %v423 = vadd.f32 0.0, %v422
      %v424 = vpop.f32.mrf.mxu0
      %425 = vmatprep.mubr.f32.mxu0 0.0
      %426 = vmatmul.mubr.f32.gmra.mxu0 %v324
      %v427 = vpop.f32.mrf.mxu0
      %v428 = vadd.f32 0.0, %v427
      %v429 = vpop.f32.mrf.mxu0
      %430 = vdwg.mxu0
      %v431 = vmul.f32 %v393, 0.001953125
      %v432 = vmul.f32 %v398, 0.001953125
      %v433 = vmul.f32 %v403, 0.001953125
      %v434 = vmul.f32 %v408, 0.001953125
      %v435 = vmul.f32 %v413, 0.001953125
      %v436 = vmul.f32 %v418, 0.001953125
      %v437 = vmul.f32 %v423, 0.001953125
      %v438 = vmul.f32 %v428, 0.001953125
      %440 = vset.pattern.permute.xlu0 0
      %441 = vperm.xlu0 %440, %v431
      %v442 = vpop.permute.xlu0 %441
      %445 = vset.pattern.permute.xlu0 0
      %446 = vperm.xlu0 %445, %v432
      %v447 = vpop.permute.xlu0 %446
      %450 = vset.pattern.permute.xlu0 0
      %451 = vperm.xlu0 %450, %v433
      %v452 = vpop.permute.xlu0 %451
      %455 = vset.pattern.permute.xlu0 0
      %456 = vperm.xlu0 %455, %v434
      %v457 = vpop.permute.xlu0 %456
      %460 = vset.pattern.permute.xlu0 0
      %461 = vperm.xlu0 %460, %v435
      %v462 = vpop.permute.xlu0 %461
      %465 = vset.pattern.permute.xlu0 0
      %466 = vperm.xlu0 %465, %v436
      %v467 = vpop.permute.xlu0 %466
      %470 = vset.pattern.permute.xlu0 0
      %471 = vperm.xlu0 %470, %v437
      %v472 = vpop.permute.xlu0 %471
      %475 = vset.pattern.permute.xlu0 0
      %476 = vperm.xlu0 %475, %v438
      %v477 = vpop.permute.xlu0 %476
      %v479 = vsub.f32 %v253, %v442
      %v480 = vsub.f32 %v254, %v442
      %v481 = vsub.f32 %v255, %v447
      %v482 = vsub.f32 %v256, %v447
      %v483 = vsub.f32 %v257, %v452
      %v484 = vsub.f32 %v258, %v452
      %v485 = vsub.f32 %v259, %v457
      %v486 = vsub.f32 %v260, %v457
      %v487 = vsub.f32 %v261, %v462
      %v488 = vsub.f32 %v262, %v462
      %v489 = vsub.f32 %v263, %v467
      %v490 = vsub.f32 %v264, %v467
      %v491 = vsub.f32 %v265, %v472
      %v492 = vsub.f32 %v266, %v472
      %v493 = vsub.f32 %v267, %v477
      %v494 = vsub.f32 %v268, %v477
      %v495 = vmul.f32 %v479, %v479
      %v496 = vmul.f32 %v480, %v480
      %v497 = vmul.f32 %v481, %v481
      %v498 = vmul.f32 %v482, %v482
      %v499 = vmul.f32 %v483, %v483
      %v500 = vmul.f32 %v484, %v484
      %v501 = vmul.f32 %v485, %v485
      %v502 = vmul.f32 %v486, %v486
      %v503 = vmul.f32 %v487, %v487
      %v504 = vmul.f32 %v488, %v488
      %v505 = vmul.f32 %v489, %v489
      %v506 = vmul.f32 %v490, %v490
      %v507 = vmul.f32 %v491, %v491
      %v508 = vmul.f32 %v492, %v492
      %v509 = vmul.f32 %v493, %v493
      %v510 = vmul.f32 %v494, %v494
      %v511 = vadd.f32 %v495, %v496
      %512 = vadd.xlane.f32.xlu0 %v511
      %v513 = vpop.xlane.xlu0 %512
      %v514 = vadd.f32 %v497, %v498
      %515 = vadd.xlane.f32.xlu0 %v514
      %v516 = vpop.xlane.xlu0 %515
      %v517 = vadd.f32 %v499, %v500
      %518 = vadd.xlane.f32.xlu0 %v517
      %v519 = vpop.xlane.xlu0 %518
      %v520 = vadd.f32 %v501, %v502
      %521 = vadd.xlane.f32.xlu0 %v520
      %v522 = vpop.xlane.xlu0 %521
      %v523 = vadd.f32 %v503, %v504
      %524 = vadd.xlane.f32.xlu0 %v523
      %v525 = vpop.xlane.xlu0 %524
      %v526 = vadd.f32 %v505, %v506
      %527 = vadd.xlane.f32.xlu0 %v526
      %v528 = vpop.xlane.xlu0 %527
      %v529 = vadd.f32 %v507, %v508
      %530 = vadd.xlane.f32.xlu0 %v529
      %v531 = vpop.xlane.xlu0 %530
      %v532 = vadd.f32 %v509, %v510
      %533 = vadd.xlane.f32.xlu0 %v532
      %v534 = vpop.xlane.xlu0 %533
      %535 = vmatprep.subr.mxu0 0.0
      %536 = vmatpush1.msra.mxu0 0.0
      %537 = vmatprep.subr.mxu0 0.0
      %538 = vmatpush1.msra.mxu0 0.0
      %539 = vmatprep.subr.mxu0 0.0
      %540 = vmatpush1.msra.mxu0 0.0
      %541 = vmatprep.subr.mxu0 0.0
      %542 = vmatpush1.msra.mxu0 0.0
      %543 = vmatprep.subr.mxu0 0.0
      %544 = vmatpush1.msra.mxu0 0.0
      %545 = vmatprep.subr.mxu0 0.0
      %546 = vmatpush1.msra.mxu0 0.0
      %547 = vmatprep.subr.mxu0 0.0
      %548 = vmatpush1.msra.mxu0 0.0
      %549 = vmatprep.subr.mxu0 0.0
      %550 = vmatpush1.msra.mxu0 0.0
      %551 = vmatprep.subr.mxu0 0.0
      %552 = vmatpush1.msra.mxu0 %v534
      %553 = vmatprep.subr.mxu0 0.0
      %554 = vmatpush1.msra.mxu0 %v531
      %555 = vmatprep.subr.mxu0 0.0
      %556 = vmatpush1.msra.mxu0 %v528
      %557 = vmatprep.subr.mxu0 0.0
      %558 = vmatpush1.msra.mxu0 %v525
      %559 = vmatprep.subr.mxu0 0.0
      %560 = vmatpush1.msra.mxu0 %v522
      %561 = vmatprep.subr.mxu0 0.0
      %562 = vmatpush1.msra.mxu0 %v519
      %563 = vmatprep.subr.mxu0 0.0
      %564 = vmatpush1.msra.mxu0 %v516
      %565 = vmatprep.subr.mxu0 0.0
      %566 = vmatpush1.msra.mxu0 %v513
      %567 = vmatprep.subr.mxu0 0.0
      %568 = vmatpush2.msra.mxu0 0.0
      %569 = vmatprep.subr.mxu0 0.0
      %570 = vmatpush2.msra.mxu0 0.0
      %571 = vmatprep.subr.mxu0 0.0
      %572 = vmatpush2.msra.mxu0 0.0
      %573 = vmatprep.subr.mxu0 0.0
      %574 = vmatpush2.msra.mxu0 0.0
      %575 = vmatprep.subr.mxu0 0.0
      %576 = vmatpush2.msra.mxu0 0.0
      %577 = vmatprep.subr.mxu0 0.0
      %578 = vmatpush2.msra.mxu0 0.0
      %579 = vmatprep.subr.mxu0 0.0
      %580 = vmatpush2.msra.mxu0 0.0
      %581 = vmatprep.subr.mxu0 0.0
      %582 = vmatpush2.msra.mxu0 0.0
      %583 = vmatprep.subr.mxu0 0.0
      %584 = vmatpush2.msra.mxu0 0.0
      %585 = vmatprep.subr.mxu0 0.0
      %586 = vmatpush2.msra.mxu0 0.0
      %587 = vmatprep.subr.mxu0 0.0
      %588 = vmatpush2.msra.mxu0 0.0
      %589 = vmatprep.subr.mxu0 0.0
      %590 = vmatpush2.msra.mxu0 0.0
      %591 = vmatprep.subr.mxu0 0.0
      %592 = vmatpush2.msra.mxu0 0.0
      %593 = vmatprep.subr.mxu0 0.0
      %594 = vmatpush2.msra.mxu0 0.0
      %595 = vmatprep.subr.mxu0 0.0
      %596 = vmatpush2.msra.mxu0 0.0
      %597 = vmatprep.subr.mxu0 0.0
      %598 = vmatpush2.msra.mxu0 0.0
      %599 = vmatprep.mubr.f32.mxu0 0.0
      %600 = vmatmul.mubr.f32.gmra.mxu0 %v303
      %v601 = vpop.f32.mrf.mxu0
      %v602 = vadd.f32 0.0, %v601
      %v603 = vpop.f32.mrf.mxu0
      %604 = vmatprep.mubr.f32.mxu0 0.0
      %605 = vmatmul.mubr.f32.gmra.mxu0 %v306
      %v606 = vpop.f32.mrf.mxu0
      %v607 = vadd.f32 0.0, %v606
      %v608 = vpop.f32.mrf.mxu0
      %609 = vmatprep.mubr.f32.mxu0 0.0
      %610 = vmatmul.mubr.f32.gmra.mxu0 %v309
      %v611 = vpop.f32.mrf.mxu0
      %v612 = vadd.f32 0.0, %v611
      %v613 = vpop.f32.mrf.mxu0
      %614 = vmatprep.mubr.f32.mxu0 0.0
      %615 = vmatmul.mubr.f32.gmra.mxu0 %v312
      %v616 = vpop.f32.mrf.mxu0
      %v617 = vadd.f32 0.0, %v616
      %v618 = vpop.f32.mrf.mxu0
      %619 = vmatprep.mubr.f32.mxu0 0.0
      %620 = vmatmul.mubr.f32.gmra.mxu0 %v315
      %v621 = vpop.f32.mrf.mxu0
      %v622 = vadd.f32 0.0, %v621
      %v623 = vpop.f32.mrf.mxu0
      %624 = vmatprep.mubr.f32.mxu0 0.0
      %625 = vmatmul.mubr.f32.gmra.mxu0 %v318
      %v626 = vpop.f32.mrf.mxu0
      %v627 = vadd.f32 0.0, %v626
      %v628 = vpop.f32.mrf.mxu0
      %629 = vmatprep.mubr.f32.mxu0 0.0
      %630 = vmatmul.mubr.f32.gmra.mxu0 %v321
      %v631 = vpop.f32.mrf.mxu0
      %v632 = vadd.f32 0.0, %v631
      %v633 = vpop.f32.mrf.mxu0
      %634 = vmatprep.mubr.f32.mxu0 0.0
      %635 = vmatmul.mubr.f32.gmra.mxu0 %v324
      %v636 = vpop.f32.mrf.mxu0
      %v637 = vadd.f32 0.0, %v636
      %v638 = vpop.f32.mrf.mxu0
      %639 = vdwg.mxu0
      %v640 = vmul.f32 %v602, 0.001953125
      %v641 = vmul.f32 %v607, 0.001953125
      %v642 = vmul.f32 %v612, 0.001953125
      %v643 = vmul.f32 %v617, 0.001953125
      %v644 = vmul.f32 %v622, 0.001953125
      %v645 = vmul.f32 %v627, 0.001953125
      %v646 = vmul.f32 %v632, 0.001953125
      %v647 = vmul.f32 %v637, 0.001953125
      %v648 = vld [vmem:[%s2] sm:$0xff]
      %v649 = vld [vmem:[%s2 + $0x8] sm:$0xff]
      %v650 = vld [vmem:[%s2 + $0x10] sm:$0xff]
      %v651 = vld [vmem:[%s2 + $0x18] sm:$0xff]
      %v652 = vld [vmem:[%s2 + $0x20] sm:$0xff]
      %v653 = vld [vmem:[%s2 + $0x28] sm:$0xff]
      %v654 = vld [vmem:[%s2 + $0x30] sm:$0xff]
      %v655 = vld [vmem:[%s2 + $0x38] sm:$0xff]
      %v656 = vadd.f32 %v640, 1e-06
      %v657 = vadd.f32 %v641, 1e-06
      %v658 = vadd.f32 %v642, 1e-06
      %v659 = vadd.f32 %v643, 1e-06
      %v660 = vadd.f32 %v644, 1e-06
      %v661 = vadd.f32 %v645, 1e-06
      %v662 = vadd.f32 %v646, 1e-06
      %v663 = vadd.f32 %v647, 1e-06
      %v664 = vrsqrt.pop %v656
      %v665 = vrsqrt.pop %v657
      %v666 = vrsqrt.pop %v658
      %v667 = vrsqrt.pop %v659
      %v668 = vrsqrt.pop %v660
      %v669 = vrsqrt.pop %v661
      %v670 = vrsqrt.pop %v662
      %v671 = vrsqrt.pop %v663
      %v672 = vmul.f32 %v648, %v664
      %v673 = vmul.f32 %v649, %v665
      %v674 = vmul.f32 %v650, %v666
      %v675 = vmul.f32 %v651, %v667
      %v676 = vmul.f32 %v652, %v668
      %v677 = vmul.f32 %v653, %v669
      %v678 = vmul.f32 %v654, %v670
      %v679 = vmul.f32 %v655, %v671
      %681 = vset.pattern.permute.xlu0 0
      %682 = vperm.xlu0 %681, %v672
      %v683 = vpop.permute.xlu0 %682
      %686 = vset.pattern.permute.xlu0 0
      %687 = vperm.xlu0 %686, %v673
      %v688 = vpop.permute.xlu0 %687
      %691 = vset.pattern.permute.xlu0 0
      %692 = vperm.xlu0 %691, %v674
      %v693 = vpop.permute.xlu0 %692
      %696 = vset.pattern.permute.xlu0 0
      %697 = vperm.xlu0 %696, %v675
      %v698 = vpop.permute.xlu0 %697
      %701 = vset.pattern.permute.xlu0 0
      %702 = vperm.xlu0 %701, %v676
      %v703 = vpop.permute.xlu0 %702
      %706 = vset.pattern.permute.xlu0 0
      %707 = vperm.xlu0 %706, %v677
      %v708 = vpop.permute.xlu0 %707
      %711 = vset.pattern.permute.xlu0 0
      %712 = vperm.xlu0 %711, %v678
      %v713 = vpop.permute.xlu0 %712
      %716 = vset.pattern.permute.xlu0 0
      %717 = vperm.xlu0 %716, %v679
      %v718 = vpop.permute.xlu0 %717
      %v720 = vmul.f32 %v479, %v683
      %v721 = vmul.f32 %v480, %v683
      %v722 = vmul.f32 %v481, %v688
      %v723 = vmul.f32 %v482, %v688
      %v724 = vmul.f32 %v483, %v693
      %v725 = vmul.f32 %v484, %v693
      %v726 = vmul.f32 %v485, %v698
      %v727 = vmul.f32 %v486, %v698
      %v728 = vmul.f32 %v487, %v703
      %v729 = vmul.f32 %v488, %v703
      %v730 = vmul.f32 %v489, %v708
      %v731 = vmul.f32 %v490, %v708
      %v732 = vmul.f32 %v491, %v713
      %v733 = vmul.f32 %v492, %v713
      %v734 = vmul.f32 %v493, %v718
      %v735 = vmul.f32 %v494, %v718
      %v736 = vld [vmem:[%s3] sm:$0xff]
      %v737 = vld [vmem:[%s3 + $0x8] sm:$0xff]
      %v738 = vld [vmem:[%s3 + $0x10] sm:$0xff]
      %v739 = vld [vmem:[%s3 + $0x18] sm:$0xff]
      %v740 = vld [vmem:[%s3 + $0x20] sm:$0xff]
      %v741 = vld [vmem:[%s3 + $0x28] sm:$0xff]
      %v742 = vld [vmem:[%s3 + $0x30] sm:$0xff]
      %v743 = vld [vmem:[%s3 + $0x38] sm:$0xff]
      %745 = vset.pattern.permute.xlu0 0
      %746 = vperm.xlu0 %745, %v736
      %v747 = vpop.permute.xlu0 %746
      %750 = vset.pattern.permute.xlu0 0
      %751 = vperm.xlu0 %750, %v737
      %v752 = vpop.permute.xlu0 %751
      %755 = vset.pattern.permute.xlu0 0
      %756 = vperm.xlu0 %755, %v738
      %v757 = vpop.permute.xlu0 %756
      %760 = vset.pattern.permute.xlu0 0
      %761 = vperm.xlu0 %760, %v739
      %v762 = vpop.permute.xlu0 %761
      %765 = vset.pattern.permute.xlu0 0
      %766 = vperm.xlu0 %765, %v740
      %v767 = vpop.permute.xlu0 %766
      %770 = vset.pattern.permute.xlu0 0
      %771 = vperm.xlu0 %770, %v741
      %v772 = vpop.permute.xlu0 %771
      %775 = vset.pattern.permute.xlu0 0
      %776 = vperm.xlu0 %775, %v742
      %v777 = vpop.permute.xlu0 %776
      %780 = vset.pattern.permute.xlu0 0
      %781 = vperm.xlu0 %780, %v743
      %v782 = vpop.permute.xlu0 %781
      %v784 = vadd.f32 %v720, %v747
      %v785 = vadd.f32 %v721, %v747
      %v786 = vadd.f32 %v722, %v752
      %v787 = vadd.f32 %v723, %v752
      %v788 = vadd.f32 %v724, %v757
      %v789 = vadd.f32 %v725, %v757
      %v790 = vadd.f32 %v726, %v762
      %v791 = vadd.f32 %v727, %v762
      %v792 = vadd.f32 %v728, %v767
      %v793 = vadd.f32 %v729, %v767
      %v794 = vadd.f32 %v730, %v772
      %v795 = vadd.f32 %v731, %v772
      %v796 = vadd.f32 %v732, %v777
      %v797 = vadd.f32 %v733, %v777
      %v798 = vadd.f32 %v734, %v782
      %v799 = vadd.f32 %v735, %v782
      %v800 = vpack.c.bf16 %v786, %v784
      %v801 = vpack.c.bf16 %v787, %v785
      %v802 = vpack.c.bf16 %v790, %v788
      %v803 = vpack.c.bf16 %v791, %v789
      %v804 = vpack.c.bf16 %v794, %v792
      %v805 = vpack.c.bf16 %v795, %v793
      %v806 = vpack.c.bf16 %v798, %v796
      %v807 = vpack.c.bf16 %v799, %v797
      %v808 = vld [vmem:[%s4] sm:$0xf]
      %v809 = vld [vmem:[%s4 + $0x4] sm:$0xf]
      %v810 = vld [vmem:[%s4 + $0x8] sm:$0xf]
      %v811 = vld [vmem:[%s4 + $0xc] sm:$0xf]
      %v812 = vld [vmem:[%s4 + $0x10] sm:$0xf]
      %v813 = vld [vmem:[%s4 + $0x14] sm:$0xf]
      %v814 = vld [vmem:[%s4 + $0x18] sm:$0xf]
      %v815 = vld [vmem:[%s4 + $0x1c] sm:$0xf]
      %v816 = vld [vmem:[%s4 + $0x20] sm:$0xf]
      %v817 = vld [vmem:[%s4 + $0x24] sm:$0xf]
      %v818 = vld [vmem:[%s4 + $0x28] sm:$0xf]
      %v819 = vld [vmem:[%s4 + $0x2c] sm:$0xf]
      %v820 = vld [vmem:[%s4 + $0x30] sm:$0xf]
      %v821 = vld [vmem:[%s4 + $0x34] sm:$0xf]
      %v822 = vld [vmem:[%s4 + $0x38] sm:$0xf]
      %v823 = vld [vmem:[%s4 + $0x3c] sm:$0xf]
      %v824 = vld [vmem:[%s4 + $0x40] sm:$0xf]
      %v825 = vld [vmem:[%s4 + $0x44] sm:$0xf]
      %v826 = vld [vmem:[%s4 + $0x48] sm:$0xf]
      %v827 = vld [vmem:[%s4 + $0x4c] sm:$0xf]
      %v828 = vld [vmem:[%s4 + $0x50] sm:$0xf]
      %v829 = vld [vmem:[%s4 + $0x54] sm:$0xf]
      %v830 = vld [vmem:[%s4 + $0x58] sm:$0xf]
      %v831 = vld [vmem:[%s4 + $0x5c] sm:$0xf]
      %v832 = vld [vmem:[%s5] sm:$0xff]
      %v833 = vld [vmem:[%s5 + $0x8] sm:$0xff]
      %v834 = vld [vmem:[%s5 + $0x10] sm:$0xff]
      %v835 = vld [vmem:[%s5 + $0x18] sm:$0xff]
      %v836 = vld [vmem:[%s5 + $0x20] sm:$0xff]
      %v837 = vld [vmem:[%s5 + $0x28] sm:$0xff]
      %v838 = vld [vmem:[%s5 + $0x30] sm:$0xff]
      %v839 = vld [vmem:[%s5 + $0x38] sm:$0xff]
      %v840 = vld [vmem:[%s5 + $0x40] sm:$0xff]
      %v841 = vld [vmem:[%s5 + $0x48] sm:$0xff]
      %v842 = vld [vmem:[%s5 + $0x50] sm:$0xff]
      %v843 = vld [vmem:[%s5 + $0x58] sm:$0xff]
      %v844 = vld [vmem:[%s5 + $0x60] sm:$0xff]
      %v845 = vld [vmem:[%s5 + $0x68] sm:$0xff]
      %v846 = vld [vmem:[%s5 + $0x70] sm:$0xff]
      %v847 = vld [vmem:[%s5 + $0x78] sm:$0xff]
      %v848 = vld [vmem:[%s5 + $0x80] sm:$0xff]
      %v849 = vld [vmem:[%s5 + $0x88] sm:$0xff]
      %v850 = vld [vmem:[%s5 + $0x90] sm:$0xff]
      %v851 = vld [vmem:[%s5 + $0x98] sm:$0xff]
      %v852 = vld [vmem:[%s5 + $0xa0] sm:$0xff]
      %v853 = vld [vmem:[%s5 + $0xa8] sm:$0xff]
      %v854 = vld [vmem:[%s5 + $0xb0] sm:$0xff]
      %v855 = vld [vmem:[%s5 + $0xb8] sm:$0xff]
      %857 = vset.pattern.permute.xlu0 0
      %858 = vperm.xlu0 %857, %v832
      %v859 = vpop.permute.xlu0 %858
      %862 = vset.pattern.permute.xlu0 0
      %863 = vperm.xlu0 %862, %v833
      %v864 = vpop.permute.xlu0 %863
      %867 = vset.pattern.permute.xlu0 0
      %868 = vperm.xlu0 %867, %v834
      %v869 = vpop.permute.xlu0 %868
      %872 = vset.pattern.permute.xlu0 0
      %873 = vperm.xlu0 %872, %v835
      %v874 = vpop.permute.xlu0 %873
      %877 = vset.pattern.permute.xlu0 0
      %878 = vperm.xlu0 %877, %v836
      %v879 = vpop.permute.xlu0 %878
      %882 = vset.pattern.permute.xlu0 0
      %883 = vperm.xlu0 %882, %v837
      %v884 = vpop.permute.xlu0 %883
      %887 = vset.pattern.permute.xlu0 0
      %888 = vperm.xlu0 %887, %v838
      %v889 = vpop.permute.xlu0 %888
      %892 = vset.pattern.permute.xlu0 0
      %893 = vperm.xlu0 %892, %v839
      %v894 = vpop.permute.xlu0 %893
      %897 = vset.pattern.permute.xlu0 0
      %898 = vperm.xlu0 %897, %v840
      %v899 = vpop.permute.xlu0 %898
      %902 = vset.pattern.permute.xlu0 0
      %903 = vperm.xlu0 %902, %v841
      %v904 = vpop.permute.xlu0 %903
      %907 = vset.pattern.permute.xlu0 0
      %908 = vperm.xlu0 %907, %v842
      %v909 = vpop.permute.xlu0 %908
      %912 = vset.pattern.permute.xlu0 0
      %913 = vperm.xlu0 %912, %v843
      %v914 = vpop.permute.xlu0 %913
      %917 = vset.pattern.permute.xlu0 0
      %918 = vperm.xlu0 %917, %v844
      %v919 = vpop.permute.xlu0 %918
      %922 = vset.pattern.permute.xlu0 0
      %923 = vperm.xlu0 %922, %v845
      %v924 = vpop.permute.xlu0 %923
      %927 = vset.pattern.permute.xlu0 0
      %928 = vperm.xlu0 %927, %v846
      %v929 = vpop.permute.xlu0 %928
      %932 = vset.pattern.permute.xlu0 0
      %933 = vperm.xlu0 %932, %v847
      %v934 = vpop.permute.xlu0 %933
      %937 = vset.pattern.permute.xlu0 0
      %938 = vperm.xlu0 %937, %v848
      %v939 = vpop.permute.xlu0 %938
      %942 = vset.pattern.permute.xlu0 0
      %943 = vperm.xlu0 %942, %v849
      %v944 = vpop.permute.xlu0 %943
      %947 = vset.pattern.permute.xlu0 0
      %948 = vperm.xlu0 %947, %v850
      %v949 = vpop.permute.xlu0 %948
      %952 = vset.pattern.permute.xlu0 0
      %953 = vperm.xlu0 %952, %v851
      %v954 = vpop.permute.xlu0 %953
      %957 = vset.pattern.permute.xlu0 0
      %958 = vperm.xlu0 %957, %v852
      %v959 = vpop.permute.xlu0 %958
      %962 = vset.pattern.permute.xlu0 0
      %963 = vperm.xlu0 %962, %v853
      %v964 = vpop.permute.xlu0 %963
      %967 = vset.pattern.permute.xlu0 0
      %968 = vperm.xlu0 %967, %v854
      %v969 = vpop.permute.xlu0 %968
      %972 = vset.pattern.permute.xlu0 0
      %973 = vperm.xlu0 %972, %v855
      %v974 = vpop.permute.xlu0 %973
      %v1000 = vunpack.c.l.b16 %v808
      %v1001 = vunpack.c.l.b16 %v809
      %v1002 = vunpack.c.l.b16 %v810
      %v1003 = vunpack.c.l.b16 %v811
      %v1004 = vunpack.c.l.b16 %v812
      %v1005 = vunpack.c.l.b16 %v813
      %v1006 = vunpack.c.l.b16 %v814
      %v1007 = vunpack.c.l.b16 %v815
      %v1008 = vunpack.c.l.b16 %v816
      %v1009 = vunpack.c.l.b16 %v817
      %v1010 = vunpack.c.l.b16 %v818
      %v1011 = vunpack.c.l.b16 %v819
      %v1012 = vunpack.c.l.b16 %v820
      %v1013 = vunpack.c.l.b16 %v821
      %v1014 = vunpack.c.l.b16 %v822
      %v1015 = vunpack.c.l.b16 %v823
      %v1016 = vunpack.c.l.b16 %v824
      %v1017 = vunpack.c.l.b16 %v825
      %v1018 = vunpack.c.l.b16 %v826
      %v1019 = vunpack.c.l.b16 %v827
      %v1020 = vunpack.c.l.b16 %v828
      %v1021 = vunpack.c.l.b16 %v829
      %v1022 = vunpack.c.l.b16 %v830
      %v1023 = vunpack.c.l.b16 %v831
      %v1024 = vpack.c.b16 %v1001, %v1000
      %v1025 = vpack.c.b16 %v1003, %v1002
      %v1026 = vpack.c.b16 %v1005, %v1004
      %v1027 = vpack.c.b16 %v1007, %v1006
      %v1028 = vpack.c.b16 %v1009, %v1008
      %v1029 = vpack.c.b16 %v1011, %v1010
      %v1030 = vpack.c.b16 %v1013, %v1012
      %v1031 = vpack.c.b16 %v1015, %v1014
      %v1032 = vpack.c.b16 %v1017, %v1016
      %v1033 = vpack.c.b16 %v1019, %v1018
      %v1034 = vpack.c.b16 %v1021, %v1020
      %v1035 = vpack.c.b16 %v1023, %v1022
      %v1037 = vsel %vm301, %v1024, 0
      %v1040 = vsel %vm301, %v1025, 0
      %v1043 = vsel %vm301, %v1026, 0
      %v1046 = vsel %vm301, %v1027, 0
      %v1049 = vsel %vm301, %v1028, 0
      %v1052 = vsel %vm301, %v1029, 0
      %v1055 = vsel %vm301, %v1030, 0
      %v1058 = vsel %vm301, %v1031, 0
      %v1061 = vsel %vm301, %v1032, 0
      %v1064 = vsel %vm301, %v1033, 0
      %v1067 = vsel %vm301, %v1034, 0
      %v1070 = vsel %vm301, %v1035, 0
      %1072 = vmatprep.subr.bf16.mxu0 0
      %1073 = vmatpush1.bf16.msra.mxu0 0
      %1074 = vmatprep.subr.bf16.mxu0 0
      %1075 = vmatpush1.bf16.msra.mxu0 0
      %1076 = vmatprep.subr.bf16.mxu0 0
      %1077 = vmatpush1.bf16.msra.mxu0 0
      %1078 = vmatprep.subr.bf16.mxu0 0
      %1079 = vmatpush1.bf16.msra.mxu0 0
      %1080 = vmatprep.subr.bf16.mxu0 %v807
      %1081 = vmatpush1.bf16.msra.mxu0 %v806
      %1082 = vmatprep.subr.bf16.mxu0 %v805
      %1083 = vmatpush1.bf16.msra.mxu0 %v804
      %1084 = vmatprep.subr.bf16.mxu0 %v803
      %1085 = vmatpush1.bf16.msra.mxu0 %v802
      %1086 = vmatprep.subr.bf16.mxu0 %v801
      %1087 = vmatpush1.bf16.msra.mxu0 %v800
      %1088 = vmatprep.subr.bf16.mxu0 0
      %1089 = vmatpush2.bf16.msra.mxu0 0
      %1090 = vmatprep.subr.bf16.mxu0 0
      %1091 = vmatpush2.bf16.msra.mxu0 0
      %1092 = vmatprep.subr.bf16.mxu0 0
      %1093 = vmatpush2.bf16.msra.mxu0 0
      %1094 = vmatprep.subr.bf16.mxu0 0
      %1095 = vmatpush2.bf16.msra.mxu0 0
      %1096 = vmatprep.subr.bf16.mxu0 0
      %1097 = vmatpush2.bf16.msra.mxu0 0
      %1098 = vmatprep.subr.bf16.mxu0 0
      %1099 = vmatpush2.bf16.msra.mxu0 0
      %1100 = vmatprep.subr.bf16.mxu0 0
      %1101 = vmatpush2.bf16.msra.mxu0 0
      %1102 = vmatprep.subr.bf16.mxu0 0
      %1103 = vmatpush2.bf16.msra.mxu0 0
      %1104 = vmatprep.mubr.bf16.mxu0 0
      %1105 = vmatmul.mubr.bf16.gmra.mxu0 %v1037
      %v1106 = vpop.f32.mrf.mxu0
      %v1107 = vadd.f32 %v859, %v1106
      %v1108 = vpop.f32.mrf.mxu0
      %v1109 = vadd.f32 %v859, %v1108
      %v1110 = vpop.f32.mrf.mxu0
      %v1111 = vadd.f32 %v864, %v1110
      %v1112 = vpop.f32.mrf.mxu0
      %v1113 = vadd.f32 %v864, %v1112
      %1114 = vmatprep.mubr.bf16.mxu0 0
      %1115 = vmatmul.mubr.bf16.gmra.mxu0 %v1040
      %v1116 = vpop.f32.mrf.mxu0
      %v1117 = vadd.f32 %v869, %v1116
      %v1118 = vpop.f32.mrf.mxu0
      %v1119 = vadd.f32 %v869, %v1118
      %v1120 = vpop.f32.mrf.mxu0
      %v1121 = vadd.f32 %v874, %v1120
      %v1122 = vpop.f32.mrf.mxu0
      %v1123 = vadd.f32 %v874, %v1122
      %1124 = vmatprep.mubr.bf16.mxu0 0
      %1125 = vmatmul.mubr.bf16.gmra.mxu0 %v1043
      %v1126 = vpop.f32.mrf.mxu0
      %v1127 = vadd.f32 %v879, %v1126
      %v1128 = vpop.f32.mrf.mxu0
      %v1129 = vadd.f32 %v879, %v1128
      %v1130 = vpop.f32.mrf.mxu0
      %v1131 = vadd.f32 %v884, %v1130
      %v1132 = vpop.f32.mrf.mxu0
      %v1133 = vadd.f32 %v884, %v1132
      %1134 = vmatprep.mubr.bf16.mxu0 0
      %1135 = vmatmul.mubr.bf16.gmra.mxu0 %v1046
      %v1136 = vpop.f32.mrf.mxu0
      %v1137 = vadd.f32 %v889, %v1136
      %v1138 = vpop.f32.mrf.mxu0
      %v1139 = vadd.f32 %v889, %v1138
      %v1140 = vpop.f32.mrf.mxu0
      %v1141 = vadd.f32 %v894, %v1140
      %v1142 = vpop.f32.mrf.mxu0
      %v1143 = vadd.f32 %v894, %v1142
      %1144 = vmatprep.mubr.bf16.mxu0 0
      %1145 = vmatmul.mubr.bf16.gmra.mxu0 %v1049
      %v1146 = vpop.f32.mrf.mxu0
      %v1147 = vadd.f32 %v899, %v1146
      %v1148 = vpop.f32.mrf.mxu0
      %v1149 = vadd.f32 %v899, %v1148
      %v1150 = vpop.f32.mrf.mxu0
      %v1151 = vadd.f32 %v904, %v1150
      %v1152 = vpop.f32.mrf.mxu0
      %v1153 = vadd.f32 %v904, %v1152
      %1154 = vmatprep.mubr.bf16.mxu0 0
      %1155 = vmatmul.mubr.bf16.gmra.mxu0 %v1052
      %v1156 = vpop.f32.mrf.mxu0
      %v1157 = vadd.f32 %v909, %v1156
      %v1158 = vpop.f32.mrf.mxu0
      %v1159 = vadd.f32 %v909, %v1158
      %v1160 = vpop.f32.mrf.mxu0
      %v1161 = vadd.f32 %v914, %v1160
      %v1162 = vpop.f32.mrf.mxu0
      %v1163 = vadd.f32 %v914, %v1162
      %1164 = vmatprep.mubr.bf16.mxu0 0
      %1165 = vmatmul.mubr.bf16.gmra.mxu0 %v1055
      %v1166 = vpop.f32.mrf.mxu0
      %v1167 = vadd.f32 %v919, %v1166
      %v1168 = vpop.f32.mrf.mxu0
      %v1169 = vadd.f32 %v919, %v1168
      %v1170 = vpop.f32.mrf.mxu0
      %v1171 = vadd.f32 %v924, %v1170
      %v1172 = vpop.f32.mrf.mxu0
      %v1173 = vadd.f32 %v924, %v1172
      %1174 = vmatprep.mubr.bf16.mxu0 0
      %1175 = vmatmul.mubr.bf16.gmra.mxu0 %v1058
      %v1176 = vpop.f32.mrf.mxu0
      %v1177 = vadd.f32 %v929, %v1176
      %v1178 = vpop.f32.mrf.mxu0
      %v1179 = vadd.f32 %v929, %v1178
      %v1180 = vpop.f32.mrf.mxu0
      %v1181 = vadd.f32 %v934, %v1180
      %v1182 = vpop.f32.mrf.mxu0
      %v1183 = vadd.f32 %v934, %v1182
      %1184 = vmatprep.mubr.bf16.mxu0 0
      %1185 = vmatmul.mubr.bf16.gmra.mxu0 %v1061
      %v1186 = vpop.f32.mrf.mxu0
      %v1187 = vadd.f32 %v939, %v1186
      %v1188 = vpop.f32.mrf.mxu0
      %v1189 = vadd.f32 %v939, %v1188
      %v1190 = vpop.f32.mrf.mxu0
      %v1191 = vadd.f32 %v944, %v1190
      %v1192 = vpop.f32.mrf.mxu0
      %v1193 = vadd.f32 %v944, %v1192
      %1194 = vmatprep.mubr.bf16.mxu0 0
      %1195 = vmatmul.mubr.bf16.gmra.mxu0 %v1064
      %v1196 = vpop.f32.mrf.mxu0
      %v1197 = vadd.f32 %v949, %v1196
      %v1198 = vpop.f32.mrf.mxu0
      %v1199 = vadd.f32 %v949, %v1198
      %v1200 = vpop.f32.mrf.mxu0
      %v1201 = vadd.f32 %v954, %v1200
      %v1202 = vpop.f32.mrf.mxu0
      %v1203 = vadd.f32 %v954, %v1202
      %1204 = vmatprep.mubr.bf16.mxu0 0
      %1205 = vmatmul.mubr.bf16.gmra.mxu0 %v1067
      %v1206 = vpop.f32.mrf.mxu0
      %v1207 = vadd.f32 %v959, %v1206
      %v1208 = vpop.f32.mrf.mxu0
      %v1209 = vadd.f32 %v959, %v1208
      %v1210 = vpop.f32.mrf.mxu0
      %v1211 = vadd.f32 %v964, %v1210
      %v1212 = vpop.f32.mrf.mxu0
      %v1213 = vadd.f32 %v964, %v1212
      %1214 = vmatprep.mubr.bf16.mxu0 0
      %1215 = vmatmul.mubr.bf16.gmra.mxu0 %v1070
      %v1216 = vpop.f32.mrf.mxu0
      %v1217 = vadd.f32 %v969, %v1216
      %v1218 = vpop.f32.mrf.mxu0
      %v1219 = vadd.f32 %v969, %v1218
      %v1220 = vpop.f32.mrf.mxu0
      %v1221 = vadd.f32 %v974, %v1220
      %v1222 = vpop.f32.mrf.mxu0
      %v1223 = vadd.f32 %v974, %v1222
      %1224 = vdwg.mxu0
      %v1225 = vpack.c.bf16 %v1111, %v1107
      %v1226 = vpack.c.bf16 %v1113, %v1109
      %v1227 = vpack.c.bf16 %v1121, %v1117
      %v1228 = vpack.c.bf16 %v1123, %v1119
      %v1229 = vpack.c.bf16 %v1131, %v1127
      %v1230 = vpack.c.bf16 %v1133, %v1129
      %v1231 = vpack.c.bf16 %v1141, %v1137
      %v1232 = vpack.c.bf16 %v1143, %v1139
      %v1233 = vpack.c.bf16 %v1151, %v1147
      %v1234 = vpack.c.bf16 %v1153, %v1149
      %v1235 = vpack.c.bf16 %v1161, %v1157
      %v1236 = vpack.c.bf16 %v1163, %v1159
      %v1237 = vpack.c.bf16 %v1171, %v1167
      %v1238 = vpack.c.bf16 %v1173, %v1169
      %v1239 = vpack.c.bf16 %v1181, %v1177
      %v1240 = vpack.c.bf16 %v1183, %v1179
      %v1241 = vpack.c.bf16 %v1191, %v1187
      %v1242 = vpack.c.bf16 %v1193, %v1189
      %v1243 = vpack.c.bf16 %v1201, %v1197
      %v1244 = vpack.c.bf16 %v1203, %v1199
      %v1245 = vpack.c.bf16 %v1211, %v1207
      %v1246 = vpack.c.bf16 %v1213, %v1209
      %v1247 = vpack.c.bf16 %v1221, %v1217
      %v1248 = vpack.c.bf16 %v1223, %v1219
      %v1273 = vunpack.c.l.b16 %v1225
      %v1274 = vunpack.c.l.b16 %v1226
      %v1275 = vunpack.c.h.b16 %v1225
      %v1276 = vunpack.c.h.b16 %v1226
      %v1277 = vunpack.c.l.b16 %v1227
      %v1278 = vunpack.c.l.b16 %v1228
      %v1279 = vunpack.c.h.b16 %v1227
      %v1280 = vunpack.c.h.b16 %v1228
      %v1281 = vunpack.c.l.b16 %v1229
      %v1282 = vunpack.c.l.b16 %v1230
      %v1283 = vunpack.c.h.b16 %v1229
      %v1284 = vunpack.c.h.b16 %v1230
      %v1285 = vunpack.c.l.b16 %v1231
      %v1286 = vunpack.c.l.b16 %v1232
      %v1287 = vunpack.c.h.b16 %v1231
      %v1288 = vunpack.c.h.b16 %v1232
      %v1289 = vunpack.c.l.b16 %v1233
      %v1290 = vunpack.c.l.b16 %v1234
      %v1291 = vunpack.c.h.b16 %v1233
      %v1292 = vunpack.c.h.b16 %v1234
      %v1293 = vunpack.c.l.b16 %v1235
      %v1294 = vunpack.c.l.b16 %v1236
      %v1295 = vunpack.c.h.b16 %v1235
      %v1296 = vunpack.c.h.b16 %v1236
      %v1297 = vunpack.c.l.b16 %v1237
      %v1298 = vunpack.c.l.b16 %v1238
      %v1299 = vunpack.c.h.b16 %v1237
      %v1300 = vunpack.c.h.b16 %v1238
      %v1301 = vunpack.c.l.b16 %v1239
      %v1302 = vunpack.c.l.b16 %v1240
      %v1303 = vunpack.c.h.b16 %v1239
      %v1304 = vunpack.c.h.b16 %v1240
      %v1305 = vunpack.c.l.b16 %v1241
      %v1306 = vunpack.c.l.b16 %v1242
      %v1307 = vunpack.c.h.b16 %v1241
      %v1308 = vunpack.c.h.b16 %v1242
      %v1309 = vunpack.c.l.b16 %v1243
      %v1310 = vunpack.c.l.b16 %v1244
      %v1311 = vunpack.c.h.b16 %v1243
      %v1312 = vunpack.c.h.b16 %v1244
      %v1313 = vunpack.c.l.b16 %v1245
      %v1314 = vunpack.c.l.b16 %v1246
      %v1315 = vunpack.c.h.b16 %v1245
      %v1316 = vunpack.c.h.b16 %v1246
      %v1317 = vunpack.c.l.b16 %v1247
      %v1318 = vunpack.c.l.b16 %v1248
      %v1319 = vunpack.c.h.b16 %v1247
      %v1320 = vunpack.c.h.b16 %v1248
      %v1321 = vpack.c.b16 %v1274, %v1273
      %v1322 = vpack.c.b16 %v1276, %v1275
      %v1323 = vpack.c.b16 %v1278, %v1277
      %v1324 = vpack.c.b16 %v1280, %v1279
      %v1325 = vpack.c.b16 %v1282, %v1281
      %v1326 = vpack.c.b16 %v1284, %v1283
      %v1327 = vpack.c.b16 %v1286, %v1285
      %v1328 = vpack.c.b16 %v1288, %v1287
      %v1329 = vpack.c.b16 %v1290, %v1289
      %v1330 = vpack.c.b16 %v1292, %v1291
      %v1331 = vpack.c.b16 %v1294, %v1293
      %v1332 = vpack.c.b16 %v1296, %v1295
      %v1333 = vpack.c.b16 %v1298, %v1297
      %v1334 = vpack.c.b16 %v1300, %v1299
      %v1335 = vpack.c.b16 %v1302, %v1301
      %v1336 = vpack.c.b16 %v1304, %v1303
      %v1337 = vpack.c.b16 %v1306, %v1305
      %v1338 = vpack.c.b16 %v1308, %v1307
      %v1339 = vpack.c.b16 %v1310, %v1309
      %v1340 = vpack.c.b16 %v1312, %v1311
      %v1341 = vpack.c.b16 %v1314, %v1313
      %v1342 = vpack.c.b16 %v1316, %v1315
      %v1343 = vpack.c.b16 %v1318, %v1317
      %v1344 = vpack.c.b16 %v1320, %v1319
      %1369 = vst [vmem:[%s251] sm:$0xff] %v1321
      %1370 = vst [vmem:[%s251 + $0x8] sm:$0xff] %v1322
      %1371 = vst [vmem:[%s251 + $0x10] sm:$0xff] %v1323
      %1372 = vst [vmem:[%s251 + $0x18] sm:$0xff] %v1324
      %1373 = vst [vmem:[%s251 + $0x20] sm:$0xff] %v1325
      %1374 = vst [vmem:[%s251 + $0x28] sm:$0xff] %v1326
      %1375 = vst [vmem:[%s251 + $0x30] sm:$0xff] %v1327
      %1376 = vst [vmem:[%s251 + $0x38] sm:$0xff] %v1328
      %1377 = vst [vmem:[%s251 + $0x40] sm:$0xff] %v1329
      %1378 = vst [vmem:[%s251 + $0x48] sm:$0xff] %v1330
      %1379 = vst [vmem:[%s251 + $0x50] sm:$0xff] %v1331
      %1380 = vst [vmem:[%s251 + $0x58] sm:$0xff] %v1332
      %1381 = vst [vmem:[%s251 + $0x60] sm:$0xff] %v1333
      %1382 = vst [vmem:[%s251 + $0x68] sm:$0xff] %v1334
      %1383 = vst [vmem:[%s251 + $0x70] sm:$0xff] %v1335
      %1384 = vst [vmem:[%s251 + $0x78] sm:$0xff] %v1336
      %1385 = vst [vmem:[%s251 + $0x80] sm:$0xff] %v1337
      %1386 = vst [vmem:[%s251 + $0x88] sm:$0xff] %v1338
      %1387 = vst [vmem:[%s251 + $0x90] sm:$0xff] %v1339
      %1388 = vst [vmem:[%s251 + $0x98] sm:$0xff] %v1340
      %1389 = vst [vmem:[%s251 + $0xa0] sm:$0xff] %v1341
      %1390 = vst [vmem:[%s251 + $0xa8] sm:$0xff] %v1342
      %1391 = vst [vmem:[%s251 + $0xb0] sm:$0xff] %v1343
      %1392 = vst [vmem:[%s251 + $0xb8] sm:$0xff] %v1344
      %p1393 = scmp.lt.s32.totalorder %s17, 1
      %s1394 = scalar_select %p1393, %s17, 1
      %s1395 = smul.addr %s1394, 48
      %s1396 = smul.addr %s1395, 4
      %s1397 = scalar_lea.vmem %s6, %s1396
      // Predicated region
      $region45: #{_forward.2} parent=43 // pred_check
        %p1398 = pneg %p166
      $region46: #{_forward.2} parent=43 // pred_check_branch
        %1400 = sbr.rel (%p1398) target = $region48
      $region47: #{_forward.2} parent=43 // pred_region
        _
      $region48: #{_forward.2} parent=43 // pred_fallthru
        _
    $region44: #{_forward.2} parent=5 // pred_fallthru
      _
    %p1401 = scmp.le.s32.totalorder 2, %s12
    // Predicated region
    $region49: #{_forward.2} parent=5 // pred_check
      %p1402 = pneg %p1401
    $region50: #{_forward.2} parent=5 // pred_check_branch
      %1404 = sbr.rel (%p1402) target = $region52
    $region51: #{_forward.2} parent=5 // pred_region
      %s1405 = ssub.s32 %s12, 2
      // Predicated region
      $region53: #{_forward.2} parent=51 // pred_check
        %p1406 = pneg %p172
      $region54: #{_forward.2} parent=51 // pred_check_branch
        %1408 = sbr.rel (%p1406) target = $region56
      $region55: #{_forward.2} parent=51 // pred_region
        %p1409 = scmp.lt.s32.totalorder %s18, 1
        %s1410 = scalar_select %p1409, %s18, 1
        %s1411 = smul.addr %s1410, 48
        %s1412 = smul.addr %s1411, 4
        %s1413 = scalar_lea.vmem %s6, %s1412
      $region56: #{_forward.2} parent=51 // pred_fallthru
        _
    $region52: #{_forward.2} parent=5 // pred_fallthru
      _
  $region6: #{_forward.2} parent=0 // loop_footer
    %s16 = sadd.s32 1, %s12
  $region7: #{_forward.2} parent=0 // loop_footer_branch
    %11 = sbr.rel target = $region3
  $region8: #{_forward.2} parent=0 // loop_exit
    _

// kernel: _forward.3
$region0: #{_forward.3}
  #allocation0 [shape = 'u32[]', space=smem, size = 0x4, offset = 0x4, fixed_abs, tag = 'smem constant byte address 0x4 - core index']
  #allocation1 [shape = 'u32[144,128]{1,0:T(1,128)}', space=vmem, size = 0x12000, scoped, tag = 'internal scratch']
  %s0 = inlined_call_operand.vmem [shape: bf16[2,192,256], index: 0, kind: input, shape index: {}, may-alias: {0,1,2}]
  %s1 = inlined_call_operand.vmem [shape: bf16[2,192,256], index: 1, kind: input, shape index: {}, may-alias: {0,1,2}]
  %s2 = inlined_call_operand.vmem [shape: bf16[2,192,256], index: 2, kind: input, shape index: {}, may-alias: {0,1,2}]
  %s3 = inlined_call_operand.vmem [shape: bf16[64,64], index: 3, kind: input, shape index: {}]
  %s4 = inlined_call_operand.vmem [shape: f32[64,1], index: 4, kind: input, shape index: {}]
  %s5 = inlined_call_operand.vmem [shape: f32[2,64,256], index: 5, kind: input, shape index: {}]
  %s6 = inlined_call_operand.vmem [shape: f32[2,64,256], index: 6, kind: output, shape index: {}]
  %s7 = sld [smem:[#allocation0]]
  $region57: #{_forward.3} parent=0
    _
  %s9 = ssub.s32 1, %s7
  %s10 = scalar_select 0, %s9, %s7
  loop: start=0, step=1, limit=4
  $region2: #{_forward.3} parent=0 // loop_pre_header
    _
  $region3: #{_forward.3} parent=0 // loop_header
    %s12 = sphi 0, %s16
    %p13 = scmp.ge.s32.totalorder %s12, 4
    %s19 = sphi 0, %s31
    %s20 = sphi 0, %s27
    %s21 = sphi 0, %s19
    %s22 = sphi 0, %s20
    %s23 = sphi 0, %s21
    %s24 = sphi 0, %s22
    %s36 = sphi 0, %s38
    %s39 = sphi 0, %s36
    %s40 = sphi 0, %s39
    %s56 = sphi 0, %s40
    %s62 = sphi 0, %s64
    %s65 = sphi 0, %s62
    %s66 = sphi 0, %s65
    %s82 = sphi 0, %s66
    %s88 = sphi 0, %s90
    %s91 = sphi 0, %s88
    %s92 = sphi 0, %s91
    %s108 = sphi 0, %s92
    %s112 = sphi 0, %s112
    %s114 = sphi 0, %s112
    %s115 = sphi 0, %s114
    %s129 = sphi 0, %s115
    %s133 = sphi 0, %s133
    %s135 = sphi 0, %s133
    %s136 = sphi 0, %s135
    %s150 = sphi 0, %s136
    %s158 = sphi 0, %s160
    %s161 = sphi 0, %s158
    %s162 = sphi 0, %s161
    %s178 = sphi 0, %s162
    %s186 = sphi 0, %s188
    %s189 = sphi 0, %s186
    %s190 = sphi 0, %s189
    %s206 = sphi 0, %s190
  $region4: #{_forward.3} parent=0 // loop_header_branch
    %15 = sbr.rel (%p13) target = $region8
  $region5: #{_forward.3} parent=0 // loop_body
    %s17 = ssub.s32 %s12, 1
    %s18 = ssub.s32 %s12, 2
    %s25 = sadd.s32 1, %s20
    %p26 = scmp.ge.s32.totalorder %s25, 1
    %s27 = scalar_select %p26, 0, %s25
    %s28 = sadd.s32 1, %s19
    %s29 = scalar_select %p26, %s28, %s19
    %p30 = scmp.ge.s32.totalorder %s29, 2
    %s31 = scalar_select %p30, 0, %s29
    %s32 = ssub.s32 %s19, %s31
    %s33 = ssub.s32 %s20, %s27
    %s34 = sor.u32 %s32, %s33
    %p35 = scmp.eq.s32.totalorder %s34, 0
    %s37 = sadd.s32 %s36, 1
    %s38 = scalar_select %p35, %s36, %s37
    %p41 = pneg %p35
    %p42 = scmp.eq.s32.totalorder %s12, 1
    %p43 = por %p41, %p42
    %p44 = scmp.ne.s32.totalorder %s36, %s39
    %p45 = scmp.eq.s32.totalorder %s12, 0
    %p46 = por %p44, %p45
    %p47 = scmp.ne.s32.totalorder %s36, %s39
    %p48 = scmp.eq.s32.totalorder %s17, 1
    %p49 = por %p47, %p48
    %p50 = scmp.ne.s32.totalorder %s39, %s40
    %p51 = scmp.eq.s32.totalorder %s17, 0
    %p52 = por %p50, %p51
    %p53 = scmp.ne.s32.totalorder %s39, %s40
    %p54 = scmp.eq.s32.totalorder %s18, 1
    %p55 = por %p53, %p54
    %p57 = scmp.ne.s32.totalorder %s40, %s56
    %p58 = scmp.eq.s32.totalorder %s18, 0
    %p59 = por %p57, %p58
    %s60 = ssub.s32 %s19, %s31
    %p61 = scmp.eq.s32.totalorder %s60, 0
    %s63 = sadd.s32 %s62, 1
    %s64 = scalar_select %p61, %s62, %s63
    %p67 = pneg %p61
    %p68 = scmp.eq.s32.totalorder %s12, 1
    %p69 = por %p67, %p68
    %p70 = scmp.ne.s32.totalorder %s62, %s65
    %p71 = scmp.eq.s32.totalorder %s12, 0
    %p72 = por %p70, %p71
    %p73 = scmp.ne.s32.totalorder %s62, %s65
    %p74 = scmp.eq.s32.totalorder %s17, 1
    %p75 = por %p73, %p74
    %p76 = scmp.ne.s32.totalorder %s65, %s66
    %p77 = scmp.eq.s32.totalorder %s17, 0
    %p78 = por %p76, %p77
    %p79 = scmp.ne.s32.totalorder %s65, %s66
    %p80 = scmp.eq.s32.totalorder %s18, 1
    %p81 = por %p79, %p80
    %p83 = scmp.ne.s32.totalorder %s66, %s82
    %p84 = scmp.eq.s32.totalorder %s18, 0
    %p85 = por %p83, %p84
    %s86 = ssub.s32 %s19, %s31
    %p87 = scmp.eq.s32.totalorder %s86, 0
    %s89 = sadd.s32 %s88, 1
    %s90 = scalar_select %p87, %s88, %s89
    %p93 = pneg %p87
    %p94 = scmp.eq.s32.totalorder %s12, 1
    %p95 = por %p93, %p94
    %p96 = scmp.ne.s32.totalorder %s88, %s91
    %p97 = scmp.eq.s32.totalorder %s12, 0
    %p98 = por %p96, %p97
    %p99 = scmp.ne.s32.totalorder %s88, %s91
    %p100 = scmp.eq.s32.totalorder %s17, 1
    %p101 = por %p99, %p100
    %p102 = scmp.ne.s32.totalorder %s91, %s92
    %p103 = scmp.eq.s32.totalorder %s17, 0
    %p104 = por %p102, %p103
    %p105 = scmp.ne.s32.totalorder %s91, %s92
    %p106 = scmp.eq.s32.totalorder %s18, 1
    %p107 = por %p105, %p106
    %p109 = scmp.ne.s32.totalorder %s92, %s108
    %p110 = scmp.eq.s32.totalorder %s18, 0
    %p111 = por %p109, %p110
    %s113 = sadd.s32 %s112, 1
    %p116 = scmp.eq.s32.totalorder %s12, 1
    %p117 = scmp.ne.s32.totalorder %s112, %s114
    %p118 = scmp.eq.s32.totalorder %s12, 0
    %p119 = por %p117, %p118
    %p120 = scmp.ne.s32.totalorder %s112, %s114
    %p121 = scmp.eq.s32.totalorder %s17, 1
    %p122 = por %p120, %p121
    %p123 = scmp.ne.s32.totalorder %s114, %s115
    %p124 = scmp.eq.s32.totalorder %s17, 0
    %p125 = por %p123, %p124
    %p126 = scmp.ne.s32.totalorder %s114, %s115
    %p127 = scmp.eq.s32.totalorder %s18, 1
    %p128 = por %p126, %p127
    %p130 = scmp.ne.s32.totalorder %s115, %s129
    %p131 = scmp.eq.s32.totalorder %s18, 0
    %p132 = por %p130, %p131
    %s134 = sadd.s32 %s133, 1
    %p137 = scmp.eq.s32.totalorder %s12, 1
    %p138 = scmp.ne.s32.totalorder %s133, %s135
    %p139 = scmp.eq.s32.totalorder %s12, 0
    %p140 = por %p138, %p139
    %p141 = scmp.ne.s32.totalorder %s133, %s135
    %p142 = scmp.eq.s32.totalorder %s17, 1
    %p143 = por %p141, %p142
    %p144 = scmp.ne.s32.totalorder %s135, %s136
    %p145 = scmp.eq.s32.totalorder %s17, 0
    %p146 = por %p144, %p145
    %p147 = scmp.ne.s32.totalorder %s135, %s136
    %p148 = scmp.eq.s32.totalorder %s18, 1
    %p149 = por %p147, %p148
    %p151 = scmp.ne.s32.totalorder %s136, %s150
    %p152 = scmp.eq.s32.totalorder %s18, 0
    %p153 = por %p151, %p152
    %s154 = ssub.s32 %s19, %s31
    %s155 = ssub.s32 %s20, %s27
    %s156 = sor.u32 %s154, %s155
    %p157 = scmp.eq.s32.totalorder %s156, 0
    %s159 = sadd.s32 %s158, 1
    %s160 = scalar_select %p157, %s158, %s159
    %p163 = pneg %p157
    %p164 = scmp.eq.s32.totalorder %s12, 1
    %p165 = por %p163, %p164
    %p166 = scmp.ne.s32.totalorder %s158, %s161
    %p167 = scmp.eq.s32.totalorder %s12, 0
    %p168 = por %p166, %p167
    %p169 = scmp.ne.s32.totalorder %s158, %s161
    %p170 = scmp.eq.s32.totalorder %s17, 1
    %p171 = por %p169, %p170
    %p172 = scmp.ne.s32.totalorder %s161, %s162
    %p173 = scmp.eq.s32.totalorder %s17, 0
    %p174 = por %p172, %p173
    %p175 = scmp.ne.s32.totalorder %s161, %s162
    %p176 = scmp.eq.s32.totalorder %s18, 1
    %p177 = por %p175, %p176
    %p179 = scmp.ne.s32.totalorder %s162, %s178
    %p180 = scmp.eq.s32.totalorder %s18, 0
    %p181 = por %p179, %p180
    %s182 = ssub.s32 %s19, %s31
    %s183 = ssub.s32 %s20, %s27
    %s184 = sor.u32 %s182, %s183
    %p185 = scmp.eq.s32.totalorder %s184, 0
    %s187 = sadd.s32 %s186, 1
    %s188 = scalar_select %p185, %s186, %s187
    %p191 = pneg %p185
    %p192 = scmp.eq.s32.totalorder %s12, 1
    %p193 = por %p191, %p192
    %p194 = scmp.ne.s32.totalorder %s186, %s189
    %p195 = scmp.eq.s32.totalorder %s12, 0
    %p196 = por %p194, %p195
    %p197 = scmp.ne.s32.totalorder %s186, %s189
    %p198 = scmp.eq.s32.totalorder %s17, 1
    %p199 = por %p197, %p198
    %p200 = scmp.ne.s32.totalorder %s189, %s190
    %p201 = scmp.eq.s32.totalorder %s17, 0
    %p202 = por %p200, %p201
    %p203 = scmp.ne.s32.totalorder %s189, %s190
    %p204 = scmp.eq.s32.totalorder %s18, 1
    %p205 = por %p203, %p204
    %p207 = scmp.ne.s32.totalorder %s190, %s206
    %p208 = scmp.eq.s32.totalorder %s18, 0
    %p209 = por %p207, %p208
    %p210 = scmp.le.s32.totalorder 1, %s12
    %p211 = scmp.lt.s32.totalorder %s12, 3
    %p212 = pnand %p210, %p211
    %p213 = pneg %p212
    // Predicated region
    $region9: #{_forward.3} parent=5 // pred_check
      _
    $region10: #{_forward.3} parent=5 // pred_check_branch
      %215 = sbr.rel (%p212) target = $region12
    $region11: #{_forward.3} parent=5 // pred_region
      %s216 = ssub.s32 %s12, 1
      // Predicated region
      $region13: #{_forward.3} parent=11 // pred_check
        %p217 = pneg %p125
      $region14: #{_forward.3} parent=11 // pred_check_branch
        %219 = sbr.rel (%p217) target = $region16
      $region15: #{_forward.3} parent=11 // pred_region
        _
      $region16: #{_forward.3} parent=11 // pred_fallthru
        _
      // Predicated region
      $region17: #{_forward.3} parent=11 // pred_check
        %p220 = pneg %p146
      $region18: #{_forward.3} parent=11 // pred_check_branch
        %222 = sbr.rel (%p220) target = $region20
      $region19: #{_forward.3} parent=11 // pred_region
        _
      $region20: #{_forward.3} parent=11 // pred_fallthru
        _
    $region12: #{_forward.3} parent=5 // pred_fallthru
      _
    %p223 = scmp.lt.s32.totalorder %s12, 2
    // Predicated region
    $region21: #{_forward.3} parent=5 // pred_check
      %p224 = pneg %p223
    $region22: #{_forward.3} parent=5 // pred_check_branch
      %226 = sbr.rel (%p224) target = $region24
    $region23: #{_forward.3} parent=5 // pred_region
      // Predicated region
      $region25: #{_forward.3} parent=23 // pred_check
        %p227 = pneg %p46
      $region26: #{_forward.3} parent=23 // pred_check_branch
        %229 = sbr.rel (%p227) target = $region28
      $region27: #{_forward.3} parent=23 // pred_region
        %s230 = smul.u32 2, %s20
        %p231 = scmp.lt.s32.totalorder %s19, 1
        %s232 = scalar_select %p231, %s19, 1
        %p233 = scmp.lt.s32.totalorder %s230, 1
        %s234 = scalar_select %p233, %s230, 1
        %s235 = smul.addr %s232, 48
        %s236 = sadd.s32 %s234, %s235
        %s237 = smul.addr %s236, 4
        %s238 = scalar_lea.vmem %s0, %s237
        %s239 = smul.u32 2, %s20
      $region28: #{_forward.3} parent=23 // pred_fallthru
        _
      // Predicated region
      $region29: #{_forward.3} parent=23 // pred_check
        %p240 = pneg %p72
      $region30: #{_forward.3} parent=23 // pred_check_branch
        %242 = sbr.rel (%p240) target = $region32
      $region31: #{_forward.3} parent=23 // pred_region
        %p243 = scmp.lt.s32.totalorder %s19, 1
        %s244 = scalar_select %p243, %s19, 1
        %s245 = smul.addr %s244, 48
        %s246 = sadd.s32 16, %s245
        %s247 = smul.addr %s246, 4
        %s248 = scalar_lea.vmem %s1, %s247
      $region32: #{_forward.3} parent=23 // pred_fallthru
        _
      // Predicated region
      $region33: #{_forward.3} parent=23 // pred_check
        %p249 = pneg %p98
      $region34: #{_forward.3} parent=23 // pred_check_branch
        %251 = sbr.rel (%p249) target = $region36
      $region35: #{_forward.3} parent=23 // pred_region
        %p252 = scmp.lt.s32.totalorder %s19, 1
        %s253 = scalar_select %p252, %s19, 1
        %s254 = smul.addr %s253, 48
        %s255 = sadd.s32 32, %s254
        %s256 = smul.addr %s255, 4
        %s257 = scalar_lea.vmem %s2, %s256
      $region36: #{_forward.3} parent=23 // pred_fallthru
        _
      // Predicated region
      $region37: #{_forward.3} parent=23 // pred_check
        %p258 = pneg %p168
      $region38: #{_forward.3} parent=23 // pred_check_branch
        %260 = sbr.rel (%p258) target = $region40
      $region39: #{_forward.3} parent=23 // pred_region
        %s261 = smul.u32 2, %s20
        %p262 = scmp.lt.s32.totalorder %s19, 1
        %s263 = scalar_select %p262, %s19, 1
        %p264 = scmp.lt.s32.totalorder %s261, 1
        %s265 = scalar_select %p264, %s261, 1
        %s266 = smul.addr %s263, 16
        %s267 = sadd.s32 %s265, %s266
        %s268 = smul.addr %s267, 8
        %s269 = scalar_lea.vmem %s5, %s268
        %s270 = smul.u32 2, %s20
      $region40: #{_forward.3} parent=23 // pred_fallthru
        _
    $region24: #{_forward.3} parent=5 // pred_fallthru
      _
    %p271 = scmp.le.s32.totalorder 1, %s12
    %p272 = scmp.lt.s32.totalorder %s12, 3
    %p273 = pnand %p271, %p272
    %p274 = pneg %p273
    // Predicated region
    $region41: #{_forward.3} parent=5 // pred_check
      _
    $region42: #{_forward.3} parent=5 // pred_check_branch
      %276 = sbr.rel (%p273) target = $region44
    $region43: #{_forward.3} parent=5 // pred_region
      %s277 = ssub.s32 %s12, 1
      %s278 = smul.u32 2, %s22
      %p279 = scmp.lt.s32.totalorder %s21, 1
      %s280 = scalar_select %p279, %s21, 1
      %p281 = scmp.lt.s32.totalorder %s278, 1
      %s282 = scalar_select %p281, %s278, 1
      %s283 = smul.addr %s280, 48
      %s284 = sadd.s32 %s282, %s283
      %s285 = smul.addr %s284, 4
      %s286 = scalar_lea.vmem %s0, %s285
      %p287 = pneg %p52
      %p288 = pneg %p49
      %p289 = scmp.lt.s32.totalorder %s21, 1
      %s290 = scalar_select %p289, %s21, 1
      %s291 = smul.addr %s290, 48
      %s292 = sadd.s32 16, %s291
      %s293 = smul.addr %s292, 4
      %s294 = scalar_lea.vmem %s1, %s293
      %p295 = pneg %p78
      %p296 = pneg %p75
      %p297 = scmp.lt.s32.totalorder %s21, 1
      %s298 = scalar_select %p297, %s21, 1
      %s299 = smul.addr %s298, 48
      %s300 = sadd.s32 32, %s299
      %s301 = smul.addr %s300, 4
      %s302 = scalar_lea.vmem %s2, %s301
      %p303 = pneg %p104
      %p304 = pneg %p101
      %p305 = pneg %p125
      %p306 = pneg %p122
      %p307 = pneg %p146
      %p308 = pneg %p143
      %s309 = smul.u32 2, %s22
      %p310 = scmp.lt.s32.totalorder %s21, 1
      %s311 = scalar_select %p310, %s21, 1
      %p312 = scmp.lt.s32.totalorder %s309, 1
      %s313 = scalar_select %p312, %s309, 1
      %s314 = smul.addr %s311, 16
      %s315 = sadd.s32 %s313, %s314
      %s316 = smul.addr %s315, 8
      %s317 = scalar_lea.vmem %s5, %s316
      %p318 = pneg %p174
      %p319 = pneg %p171
      %p320 = pneg %p202
      %p321 = pneg %p199
      %s322 = smul.u32 2, %s22
      %p323 = scmp.lt.s32.totalorder %s21, 1
      %s324 = scalar_select %p323, %s21, 1
      %p325 = scmp.lt.s32.totalorder %s322, 1
      %s326 = scalar_select %p325, %s322, 1
      %s327 = smul.addr %s324, 16
      %s328 = sadd.s32 %s326, %s327
      %s329 = smul.addr %s328, 8
      %s330 = scalar_lea.vmem %s6, %s329
      %s331 = smul.u32 2, %s22
      %p332 = scmp.lt.s32.totalorder %s21, 1
      %s333 = scalar_select %p332, %s21, 1
      %p334 = scmp.lt.s32.totalorder %s331, 1
      %s335 = scalar_select %p334, %s331, 1
      %s336 = smul.addr %s333, 48
      %s337 = sadd.s32 %s335, %s336
      %s338 = smul.addr %s337, 4
      %s339 = scalar_lea.vmem %s0, %s338
      %s340 = smul.u32 2, %s22
      %p341 = scmp.lt.s32.totalorder %s21, 1
      %s342 = scalar_select %p341, %s21, 1
      %s343 = smul.addr %s342, 48
      %s344 = sadd.s32 16, %s343
      %s345 = smul.addr %s344, 4
      %s346 = scalar_lea.vmem %s1, %s345
      %p347 = scmp.lt.s32.totalorder %s21, 1
      %s348 = scalar_select %p347, %s21, 1
      %s349 = smul.addr %s348, 48
      %s350 = sadd.s32 32, %s349
      %s351 = smul.addr %s350, 4
      %s352 = scalar_lea.vmem %s2, %s351
      %s353 = smul.u32 2, %s22
      %p354 = scmp.lt.s32.totalorder %s21, 1
      %s355 = scalar_select %p354, %s21, 1
      %p356 = scmp.lt.s32.totalorder %s353, 1
      %s357 = scalar_select %p356, %s353, 1
      %s358 = smul.addr %s355, 16
      %s359 = sadd.s32 %s357, %s358
      %s360 = smul.addr %s359, 8
      %s361 = scalar_lea.vmem %s5, %s360
      %s362 = smul.u32 2, %s22
      %s363 = smul.u32 2, %s22
      %p364 = scmp.lt.s32.totalorder %s21, 1
      %s365 = scalar_select %p364, %s21, 1
      %p366 = scmp.lt.s32.totalorder %s363, 1
      %s367 = scalar_select %p366, %s363, 1
      %s368 = smul.addr %s365, 16
      %s369 = sadd.s32 %s367, %s368
      %s370 = smul.addr %s369, 8
      %s371 = scalar_lea.vmem %s6, %s370
      %s372 = smul.u32 2, %s22
      %v374 = vld [vmem:[%s339] sm:$0xff]
      %v375 = vld [vmem:[%s339 + $0x8] sm:$0xff]
      %v376 = vld [vmem:[%s339 + $0x10] sm:$0xff]
      %v377 = vld [vmem:[%s339 + $0x18] sm:$0xff]
      %v378 = vld [vmem:[%s339 + $0x20] sm:$0xff]
      %v379 = vld [vmem:[%s339 + $0x28] sm:$0xff]
      %v380 = vld [vmem:[%s339 + $0x30] sm:$0xff]
      %v381 = vld [vmem:[%s339 + $0x38] sm:$0xff]
      %v382 = vld [vmem:[%s346] sm:$0xff]
      %v383 = vld [vmem:[%s346 + $0x8] sm:$0xff]
      %v384 = vld [vmem:[%s346 + $0x10] sm:$0xff]
      %v385 = vld [vmem:[%s346 + $0x18] sm:$0xff]
      %v386 = vld [vmem:[%s346 + $0x20] sm:$0xff]
      %v387 = vld [vmem:[%s346 + $0x28] sm:$0xff]
      %v388 = vld [vmem:[%s346 + $0x30] sm:$0xff]
      %v389 = vld [vmem:[%s346 + $0x38] sm:$0xff]
      %v390 = vld [vmem:[%s352] sm:$0xff]
      %v391 = vld [vmem:[%s352 + $0x8] sm:$0xff]
      %v392 = vld [vmem:[%s352 + $0x10] sm:$0xff]
      %v393 = vld [vmem:[%s352 + $0x18] sm:$0xff]
      %v394 = vld [vmem:[%s352 + $0x20] sm:$0xff]
      %v395 = vld [vmem:[%s352 + $0x28] sm:$0xff]
      %v396 = vld [vmem:[%s352 + $0x30] sm:$0xff]
      %v397 = vld [vmem:[%s352 + $0x38] sm:$0xff]
      %v406 = vunpack.c.l.b16 %v374
      %v407 = vunpack.c.h.b16 %v374
      %v408 = vunpack.c.l.b16 %v375
      %v409 = vunpack.c.h.b16 %v375
      %v410 = vunpack.c.l.b16 %v376
      %v411 = vunpack.c.h.b16 %v376
      %v412 = vunpack.c.l.b16 %v377
      %v413 = vunpack.c.h.b16 %v377
      %v414 = vunpack.c.l.b16 %v378
      %v415 = vunpack.c.h.b16 %v378
      %v416 = vunpack.c.l.b16 %v379
      %v417 = vunpack.c.h.b16 %v379
      %v418 = vunpack.c.l.b16 %v380
      %v419 = vunpack.c.h.b16 %v380
      %v420 = vunpack.c.l.b16 %v381
      %v421 = vunpack.c.h.b16 %v381
      %v422 = vpack.c.b16 %v408, %v406
      %v423 = vpack.c.b16 %v409, %v407
      %v424 = vpack.c.b16 %v412, %v410
      %v425 = vpack.c.b16 %v413, %v411
      %v426 = vpack.c.b16 %v416, %v414
      %v427 = vpack.c.b16 %v417, %v415
      %v428 = vpack.c.b16 %v420, %v418
      %v429 = vpack.c.b16 %v421, %v419
      %438 = vxpose.xlu0.c.b16.start [1/8] %v422, 128
      %439 = vxpose.xlu0.c.b16.cont [2/8] %v424, 128
      %440 = vxpose.xlu0.c.b16.cont [3/8] %v426, 128
      %441 = vxpose.xlu0.c.b16.cont [4/8] %v428, 128
      %442 = vxpose.xlu0.c.b16.cont [5/8] 0, 128
      %443 = vxpose.xlu0.c.b16.cont [6/8] 0, 128
      %444 = vxpose.xlu0.c.b16.cont [7/8] 0, 128
      %445 = vxpose.xlu0.c.b16.end [8/8] 0, 128
      %v446 = vpop.trf.xlu0
      %v447 = vpop.trf.xlu0
      %v448 = vpop.trf.xlu0
      %v449 = vpop.trf.xlu0
      %v450 = vpop.trf.xlu0
      %v451 = vpop.trf.xlu0
      %v452 = vpop.trf.xlu0
      %v453 = vpop.trf.xlu0
      %454 = vxpose.xlu0.c.b16.start [1/8] %v423, 128
      %455 = vxpose.xlu0.c.b16.cont [2/8] %v425, 128
      %456 = vxpose.xlu0.c.b16.cont [3/8] %v427, 128
      %457 = vxpose.xlu0.c.b16.cont [4/8] %v429, 128
      %458 = vxpose.xlu0.c.b16.cont [5/8] 0, 128
      %459 = vxpose.xlu0.c.b16.cont [6/8] 0, 128
      %460 = vxpose.xlu0.c.b16.cont [7/8] 0, 128
      %461 = vxpose.xlu0.c.b16.end [8/8] 0, 128
      %v462 = vpop.trf.xlu0
      %v463 = vpop.trf.xlu0
      %v464 = vpop.trf.xlu0
      %v465 = vpop.trf.xlu0
      %v466 = vpop.trf.xlu0
      %v467 = vpop.trf.xlu0
      %v468 = vpop.trf.xlu0
      %v469 = vpop.trf.xlu0
      %v478 = vunpack.c.l.b16 %v382
      %v479 = vunpack.c.h.b16 %v382
      %v480 = vunpack.c.l.b16 %v383
      %v481 = vunpack.c.h.b16 %v383
      %v482 = vunpack.c.l.b16 %v384
      %v483 = vunpack.c.h.b16 %v384
      %v484 = vunpack.c.l.b16 %v385
      %v485 = vunpack.c.h.b16 %v385
      %v486 = vunpack.c.l.b16 %v386
      %v487 = vunpack.c.h.b16 %v386
      %v488 = vunpack.c.l.b16 %v387
      %v489 = vunpack.c.h.b16 %v387
      %v490 = vunpack.c.l.b16 %v388
      %v491 = vunpack.c.h.b16 %v388
      %v492 = vunpack.c.l.b16 %v389
      %v493 = vunpack.c.h.b16 %v389
      %v494 = vpack.c.b16 %v480, %v478
      %v495 = vpack.c.b16 %v481, %v479
      %v496 = vpack.c.b16 %v484, %v482
      %v497 = vpack.c.b16 %v485, %v483
      %v498 = vpack.c.b16 %v488, %v486
      %v499 = vpack.c.b16 %v489, %v487
      %v500 = vpack.c.b16 %v492, %v490
      %v501 = vpack.c.b16 %v493, %v491
      %vm510 = vcmask 523264
      %v512 = vsel %vm510, %v446, 0
      %v515 = vsel %vm510, %v447, 0
      %v518 = vsel %vm510, %v448, 0
      %v521 = vsel %vm510, %v449, 0
      %v524 = vsel %vm510, %v450, 0
      %v527 = vsel %vm510, %v451, 0
      %v530 = vsel %vm510, %v452, 0
      %v533 = vsel %vm510, %v453, 0
      %v536 = vsel %vm510, %v462, 0
      %v539 = vsel %vm510, %v463, 0
      %v542 = vsel %vm510, %v464, 0
      %v545 = vsel %vm510, %v465, 0
      %v548 = vsel %vm510, %v466, 0
      %v551 = vsel %vm510, %v467, 0
      %v554 = vsel %vm510, %v468, 0
      %v557 = vsel %vm510, %v469, 0
      %559 = vmatprep.subr.bf16.mxu0 0
      %560 = vmatpush1.bf16.msra.mxu0 0
      %561 = vmatprep.subr.bf16.mxu0 0
      %562 = vmatpush1.bf16.msra.mxu0 0
      %563 = vmatprep.subr.bf16.mxu0 0
      %564 = vmatpush1.bf16.msra.mxu0 0
      %565 = vmatprep.subr.bf16.mxu0 0
      %566 = vmatpush1.bf16.msra.mxu0 0
      %567 = vmatprep.subr.bf16.mxu0 %v501
      %568 = vmatpush1.bf16.msra.mxu0 %v500
      %569 = vmatprep.subr.bf16.mxu0 %v499
      %570 = vmatpush1.bf16.msra.mxu0 %v498
      %571 = vmatprep.subr.bf16.mxu0 %v497
      %572 = vmatpush1.bf16.msra.mxu0 %v496
      %573 = vmatprep.subr.bf16.mxu0 %v495
      %574 = vmatpush1.bf16.msra.mxu0 %v494
      %575 = vmatprep.subr.bf16.mxu0 0
      %576 = vmatpush2.bf16.msra.mxu0 0
      %577 = vmatprep.subr.bf16.mxu0 0
      %578 = vmatpush2.bf16.msra.mxu0 0
      %579 = vmatprep.subr.bf16.mxu0 0
      %580 = vmatpush2.bf16.msra.mxu0 0
      %581 = vmatprep.subr.bf16.mxu0 0
      %582 = vmatpush2.bf16.msra.mxu0 0
      %583 = vmatprep.subr.bf16.mxu0 0
      %584 = vmatpush2.bf16.msra.mxu0 0
      %585 = vmatprep.subr.bf16.mxu0 0
      %586 = vmatpush2.bf16.msra.mxu0 0
      %587 = vmatprep.subr.bf16.mxu0 0
      %588 = vmatpush2.bf16.msra.mxu0 0
      %589 = vmatprep.subr.bf16.mxu0 0
      %590 = vmatpush2.bf16.msra.mxu0 0
      %591 = vmatprep.mubr.bf16.mxu0 0
      %592 = vmatmul.mubr.bf16.gmra.mxu0 %v512
      %v593 = vpop.f32.mrf.mxu0
      %v594 = vadd.f32 0.0, %v593
      %v595 = vpop.f32.mrf.mxu0
      %v596 = vadd.f32 0.0, %v595
      %v597 = vpop.f32.mrf.mxu0
      %v598 = vadd.f32 0.0, %v597
      %v599 = vpop.f32.mrf.mxu0
      %v600 = vadd.f32 0.0, %v599
      %601 = vmatprep.mubr.bf16.mxu0 0
      %602 = vmatmul.mubr.bf16.gmra.mxu0 %v515
      %v603 = vpop.f32.mrf.mxu0
      %v604 = vadd.f32 0.0, %v603
      %v605 = vpop.f32.mrf.mxu0
      %v606 = vadd.f32 0.0, %v605
      %v607 = vpop.f32.mrf.mxu0
      %v608 = vadd.f32 0.0, %v607
      %v609 = vpop.f32.mrf.mxu0
      %v610 = vadd.f32 0.0, %v609
      %611 = vmatprep.mubr.bf16.mxu0 0
      %612 = vmatmul.mubr.bf16.gmra.mxu0 %v518
      %v613 = vpop.f32.mrf.mxu0
      %v614 = vadd.f32 0.0, %v613
      %v615 = vpop.f32.mrf.mxu0
      %v616 = vadd.f32 0.0, %v615
      %v617 = vpop.f32.mrf.mxu0
      %v618 = vadd.f32 0.0, %v617
      %v619 = vpop.f32.mrf.mxu0
      %v620 = vadd.f32 0.0, %v619
      %621 = vmatprep.mubr.bf16.mxu0 0
      %622 = vmatmul.mubr.bf16.gmra.mxu0 %v521
      %v623 = vpop.f32.mrf.mxu0
      %v624 = vadd.f32 0.0, %v623
      %v625 = vpop.f32.mrf.mxu0
      %v626 = vadd.f32 0.0, %v625
      %v627 = vpop.f32.mrf.mxu0
      %v628 = vadd.f32 0.0, %v627
      %v629 = vpop.f32.mrf.mxu0
      %v630 = vadd.f32 0.0, %v629
      %631 = vmatprep.mubr.bf16.mxu0 0
      %632 = vmatmul.mubr.bf16.gmra.mxu0 %v524
      %v633 = vpop.f32.mrf.mxu0
      %v634 = vadd.f32 0.0, %v633
      %v635 = vpop.f32.mrf.mxu0
      %v636 = vadd.f32 0.0, %v635
      %v637 = vpop.f32.mrf.mxu0
      %v638 = vadd.f32 0.0, %v637
      %v639 = vpop.f32.mrf.mxu0
      %v640 = vadd.f32 0.0, %v639
      %641 = vmatprep.mubr.bf16.mxu0 0
      %642 = vmatmul.mubr.bf16.gmra.mxu0 %v527
      %v643 = vpop.f32.mrf.mxu0
      %v644 = vadd.f32 0.0, %v643
      %v645 = vpop.f32.mrf.mxu0
      %v646 = vadd.f32 0.0, %v645
      %v647 = vpop.f32.mrf.mxu0
      %v648 = vadd.f32 0.0, %v647
      %v649 = vpop.f32.mrf.mxu0
      %v650 = vadd.f32 0.0, %v649
      %651 = vmatprep.mubr.bf16.mxu0 0
      %652 = vmatmul.mubr.bf16.gmra.mxu0 %v530
      %v653 = vpop.f32.mrf.mxu0
      %v654 = vadd.f32 0.0, %v653
      %v655 = vpop.f32.mrf.mxu0
      %v656 = vadd.f32 0.0, %v655
      %v657 = vpop.f32.mrf.mxu0
      %v658 = vadd.f32 0.0, %v657
      %v659 = vpop.f32.mrf.mxu0
      %v660 = vadd.f32 0.0, %v659
      %661 = vmatprep.mubr.bf16.mxu0 0
      %662 = vmatmul.mubr.bf16.gmra.mxu0 %v533
      %v663 = vpop.f32.mrf.mxu0
      %v664 = vadd.f32 0.0, %v663
      %v665 = vpop.f32.mrf.mxu0
      %v666 = vadd.f32 0.0, %v665
      %v667 = vpop.f32.mrf.mxu0
      %v668 = vadd.f32 0.0, %v667
      %v669 = vpop.f32.mrf.mxu0
      %v670 = vadd.f32 0.0, %v669
      %671 = vmatprep.mubr.bf16.mxu0 0
      %672 = vmatmul.mubr.bf16.gmra.mxu0 %v536
      %v673 = vpop.f32.mrf.mxu0
      %v674 = vadd.f32 0.0, %v673
      %v675 = vpop.f32.mrf.mxu0
      %v676 = vadd.f32 0.0, %v675
      %v677 = vpop.f32.mrf.mxu0
      %v678 = vadd.f32 0.0, %v677
      %v679 = vpop.f32.mrf.mxu0
      %v680 = vadd.f32 0.0, %v679
      %681 = vmatprep.mubr.bf16.mxu0 0
      %682 = vmatmul.mubr.bf16.gmra.mxu0 %v539
      %v683 = vpop.f32.mrf.mxu0
      %v684 = vadd.f32 0.0, %v683
      %v685 = vpop.f32.mrf.mxu0
      %v686 = vadd.f32 0.0, %v685
      %v687 = vpop.f32.mrf.mxu0
      %v688 = vadd.f32 0.0, %v687
      %v689 = vpop.f32.mrf.mxu0
      %v690 = vadd.f32 0.0, %v689
      %691 = vmatprep.mubr.bf16.mxu0 0
      %692 = vmatmul.mubr.bf16.gmra.mxu0 %v542
      %v693 = vpop.f32.mrf.mxu0
      %v694 = vadd.f32 0.0, %v693
      %v695 = vpop.f32.mrf.mxu0
      %v696 = vadd.f32 0.0, %v695
      %v697 = vpop.f32.mrf.mxu0
      %v698 = vadd.f32 0.0, %v697
      %v699 = vpop.f32.mrf.mxu0
      %v700 = vadd.f32 0.0, %v699
      %701 = vmatprep.mubr.bf16.mxu0 0
      %702 = vmatmul.mubr.bf16.gmra.mxu0 %v545
      %v703 = vpop.f32.mrf.mxu0
      %v704 = vadd.f32 0.0, %v703
      %v705 = vpop.f32.mrf.mxu0
      %v706 = vadd.f32 0.0, %v705
      %v707 = vpop.f32.mrf.mxu0
      %v708 = vadd.f32 0.0, %v707
      %v709 = vpop.f32.mrf.mxu0
      %v710 = vadd.f32 0.0, %v709
      %711 = vmatprep.mubr.bf16.mxu0 0
      %712 = vmatmul.mubr.bf16.gmra.mxu0 %v548
      %v713 = vpop.f32.mrf.mxu0
      %v714 = vadd.f32 0.0, %v713
      %v715 = vpop.f32.mrf.mxu0
      %v716 = vadd.f32 0.0, %v715
      %v717 = vpop.f32.mrf.mxu0
      %v718 = vadd.f32 0.0, %v717
      %v719 = vpop.f32.mrf.mxu0
      %v720 = vadd.f32 0.0, %v719
      %721 = vmatprep.mubr.bf16.mxu0 0
      %722 = vmatmul.mubr.bf16.gmra.mxu0 %v551
      %v723 = vpop.f32.mrf.mxu0
      %v724 = vadd.f32 0.0, %v723
      %v725 = vpop.f32.mrf.mxu0
      %v726 = vadd.f32 0.0, %v725
      %v727 = vpop.f32.mrf.mxu0
      %v728 = vadd.f32 0.0, %v727
      %v729 = vpop.f32.mrf.mxu0
      %v730 = vadd.f32 0.0, %v729
      %731 = vmatprep.mubr.bf16.mxu0 0
      %732 = vmatmul.mubr.bf16.gmra.mxu0 %v554
      %v733 = vpop.f32.mrf.mxu0
      %v734 = vadd.f32 0.0, %v733
      %v735 = vpop.f32.mrf.mxu0
      %v736 = vadd.f32 0.0, %v735
      %v737 = vpop.f32.mrf.mxu0
      %v738 = vadd.f32 0.0, %v737
      %v739 = vpop.f32.mrf.mxu0
      %v740 = vadd.f32 0.0, %v739
      %741 = vmatprep.mubr.bf16.mxu0 0
      %742 = vmatmul.mubr.bf16.gmra.mxu0 %v557
      %v743 = vpop.f32.mrf.mxu0
      %v744 = vadd.f32 0.0, %v743
      %v745 = vpop.f32.mrf.mxu0
      %v746 = vadd.f32 0.0, %v745
      %v747 = vpop.f32.mrf.mxu0
      %v748 = vadd.f32 0.0, %v747
      %v749 = vpop.f32.mrf.mxu0
      %v750 = vadd.f32 0.0, %v749
      %751 = vdwg.mxu0
      %v752 = vmax.f32 %v594, %v596
      %753 = vmax.xlane.f32.xlu0 %v752
      %v754 = vpop.xlane.xlu0 %753
      %v755 = vmax.f32 %v598, %v600
      %756 = vmax.xlane.f32.xlu0 %v755
      %v757 = vpop.xlane.xlu0 %756
      %v758 = vmax.f32 %v604, %v606
      %759 = vmax.xlane.f32.xlu0 %v758
      %v760 = vpop.xlane.xlu0 %759
      %v761 = vmax.f32 %v608, %v610
      %762 = vmax.xlane.f32.xlu0 %v761
      %v763 = vpop.xlane.xlu0 %762
      %v764 = vmax.f32 %v614, %v616
      %765 = vmax.xlane.f32.xlu0 %v764
      %v766 = vpop.xlane.xlu0 %765
      %v767 = vmax.f32 %v618, %v620
      %768 = vmax.xlane.f32.xlu0 %v767
      %v769 = vpop.xlane.xlu0 %768
      %v770 = vmax.f32 %v624, %v626
      %771 = vmax.xlane.f32.xlu0 %v770
      %v772 = vpop.xlane.xlu0 %771
      %v773 = vmax.f32 %v628, %v630
      %774 = vmax.xlane.f32.xlu0 %v773
      %v775 = vpop.xlane.xlu0 %774
      %v776 = vmax.f32 %v634, %v636
      %777 = vmax.xlane.f32.xlu0 %v776
      %v778 = vpop.xlane.xlu0 %777
      %v779 = vmax.f32 %v638, %v640
      %780 = vmax.xlane.f32.xlu0 %v779
      %v781 = vpop.xlane.xlu0 %780
      %v782 = vmax.f32 %v644, %v646
      %783 = vmax.xlane.f32.xlu0 %v782
      %v784 = vpop.xlane.xlu0 %783
      %v785 = vmax.f32 %v648, %v650
      %786 = vmax.xlane.f32.xlu0 %v785
      %v787 = vpop.xlane.xlu0 %786
      %v788 = vmax.f32 %v654, %v656
      %789 = vmax.xlane.f32.xlu0 %v788
      %v790 = vpop.xlane.xlu0 %789
      %v791 = vmax.f32 %v658, %v660
      %792 = vmax.xlane.f32.xlu0 %v791
      %v793 = vpop.xlane.xlu0 %792
      %v794 = vmax.f32 %v664, %v666
      %795 = vmax.xlane.f32.xlu0 %v794
      %v796 = vpop.xlane.xlu0 %795
      %v797 = vmax.f32 %v668, %v670
      %798 = vmax.xlane.f32.xlu0 %v797
      %v799 = vpop.xlane.xlu0 %798
      %v800 = vmax.f32 %v674, %v676
      %801 = vmax.xlane.f32.xlu0 %v800
      %v802 = vpop.xlane.xlu0 %801
      %v803 = vmax.f32 %v678, %v680
      %804 = vmax.xlane.f32.xlu0 %v803
      %v805 = vpop.xlane.xlu0 %804
      %v806 = vmax.f32 %v684, %v686
      %807 = vmax.xlane.f32.xlu0 %v806
      %v808 = vpop.xlane.xlu0 %807
      %v809 = vmax.f32 %v688, %v690
      %810 = vmax.xlane.f32.xlu0 %v809
      %v811 = vpop.xlane.xlu0 %810
      %v812 = vmax.f32 %v694, %v696
      %813 = vmax.xlane.f32.xlu0 %v812
      %v814 = vpop.xlane.xlu0 %813
      %v815 = vmax.f32 %v698, %v700
      %816 = vmax.xlane.f32.xlu0 %v815
      %v817 = vpop.xlane.xlu0 %816
      %v818 = vmax.f32 %v704, %v706
      %819 = vmax.xlane.f32.xlu0 %v818
      %v820 = vpop.xlane.xlu0 %819
      %v821 = vmax.f32 %v708, %v710
      %822 = vmax.xlane.f32.xlu0 %v821
      %v823 = vpop.xlane.xlu0 %822
      %v824 = vmax.f32 %v714, %v716
      %825 = vmax.xlane.f32.xlu0 %v824
      %v826 = vpop.xlane.xlu0 %825
      %v827 = vmax.f32 %v718, %v720
      %828 = vmax.xlane.f32.xlu0 %v827
      %v829 = vpop.xlane.xlu0 %828
      %v830 = vmax.f32 %v724, %v726
      %831 = vmax.xlane.f32.xlu0 %v830
      %v832 = vpop.xlane.xlu0 %831
      %v833 = vmax.f32 %v728, %v730
      %834 = vmax.xlane.f32.xlu0 %v833
      %v835 = vpop.xlane.xlu0 %834
      %v836 = vmax.f32 %v734, %v736
      %837 = vmax.xlane.f32.xlu0 %v836
      %v838 = vpop.xlane.xlu0 %837
      %v839 = vmax.f32 %v738, %v740
      %840 = vmax.xlane.f32.xlu0 %v839
      %v841 = vpop.xlane.xlu0 %840
      %v842 = vmax.f32 %v744, %v746
      %843 = vmax.xlane.f32.xlu0 %v842
      %v844 = vpop.xlane.xlu0 %843
      %v845 = vmax.f32 %v748, %v750
      %846 = vmax.xlane.f32.xlu0 %v845
      %v847 = vpop.xlane.xlu0 %846
      %v848 = vsub.f32 %v594, %v754
      %v849 = vsub.f32 %v596, %v754
      %v850 = vsub.f32 %v598, %v757
      %v851 = vsub.f32 %v600, %v757
      %v852 = vsub.f32 %v604, %v760
      %v853 = vsub.f32 %v606, %v760
      %v854 = vsub.f32 %v608, %v763
      %v855 = vsub.f32 %v610, %v763
      %v856 = vsub.f32 %v614, %v766
      %v857 = vsub.f32 %v616, %v766
      %v858 = vsub.f32 %v618, %v769
      %v859 = vsub.f32 %v620, %v769
      %v860 = vsub.f32 %v624, %v772
      %v861 = vsub.f32 %v626, %v772
      %v862 = vsub.f32 %v628, %v775
      %v863 = vsub.f32 %v630, %v775
      %v864 = vsub.f32 %v634, %v778
      %v865 = vsub.f32 %v636, %v778
      %v866 = vsub.f32 %v638, %v781
      %v867 = vsub.f32 %v640, %v781
      %v868 = vsub.f32 %v644, %v784
      %v869 = vsub.f32 %v646, %v784
      %v870 = vsub.f32 %v648, %v787
      %v871 = vsub.f32 %v650, %v787
      %v872 = vsub.f32 %v654, %v790
      %v873 = vsub.f32 %v656, %v790
      %v874 = vsub.f32 %v658, %v793
      %v875 = vsub.f32 %v660, %v793
      %v876 = vsub.f32 %v664, %v796
      %v877 = vsub.f32 %v666, %v796
      %v878 = vsub.f32 %v668, %v799
      %v879 = vsub.f32 %v670, %v799
      %v880 = vsub.f32 %v674, %v802
      %v881 = vsub.f32 %v676, %v802
      %v882 = vsub.f32 %v678, %v805
      %v883 = vsub.f32 %v680, %v805
      %v884 = vsub.f32 %v684, %v808
      %v885 = vsub.f32 %v686, %v808
      %v886 = vsub.f32 %v688, %v811
      %v887 = vsub.f32 %v690, %v811
      %v888 = vsub.f32 %v694, %v814
      %v889 = vsub.f32 %v696, %v814
      %v890 = vsub.f32 %v698, %v817
      %v891 = vsub.f32 %v700, %v817
      %v892 = vsub.f32 %v704, %v820
      %v893 = vsub.f32 %v706, %v820
      %v894 = vsub.f32 %v708, %v823
      %v895 = vsub.f32 %v710, %v823
      %v896 = vsub.f32 %v714, %v826
      %v897 = vsub.f32 %v716, %v826
      %v898 = vsub.f32 %v718, %v829
      %v899 = vsub.f32 %v720, %v829
      %v900 = vsub.f32 %v724, %v832
      %v901 = vsub.f32 %v726, %v832
      %v902 = vsub.f32 %v728, %v835
      %v903 = vsub.f32 %v730, %v835
      %v904 = vsub.f32 %v734, %v838
      %v905 = vsub.f32 %v736, %v838
      %v906 = vsub.f32 %v738, %v841
      %v907 = vsub.f32 %v740, %v841
      %v908 = vsub.f32 %v744, %v844
      %v909 = vsub.f32 %v746, %v844
      %v910 = vsub.f32 %v748, %v847
      %v911 = vsub.f32 %v750, %v847
      %v912 = vmul.f32 %v848, 1.442695
      %v913 = vpow.pop %v912
      %v914 = vmul.f32 %v849, 1.442695
      %v915 = vpow.pop %v914
      %v916 = vmul.f32 %v850, 1.442695
      %v917 = vpow.pop %v916
      %v918 = vmul.f32 %v851, 1.442695
      %v919 = vpow.pop %v918
      %v920 = vmul.f32 %v852, 1.442695
      %v921 = vpow.pop %v920
      %v922 = vmul.f32 %v853, 1.442695
      %v923 = vpow.pop %v922
      %v924 = vmul.f32 %v854, 1.442695
      %v925 = vpow.pop %v924
      %v926 = vmul.f32 %v855, 1.442695
      %v927 = vpow.pop %v926
      %v928 = vmul.f32 %v856, 1.442695
      %v929 = vpow.pop %v928
      %v930 = vmul.f32 %v857, 1.442695
      %v931 = vpow.pop %v930
      %v932 = vmul.f32 %v858, 1.442695
      %v933 = vpow.pop %v932
      %v934 = vmul.f32 %v859, 1.442695
      %v935 = vpow.pop %v934
      %v936 = vmul.f32 %v860, 1.442695
      %v937 = vpow.pop %v936
      %v938 = vmul.f32 %v861, 1.442695
      %v939 = vpow.pop %v938
      %v940 = vmul.f32 %v862, 1.442695
      %v941 = vpow.pop %v940
      %v942 = vmul.f32 %v863, 1.442695
      %v943 = vpow.pop %v942
      %v944 = vmul.f32 %v864, 1.442695
      %v945 = vpow.pop %v944
      %v946 = vmul.f32 %v865, 1.442695
      %v947 = vpow.pop %v946
      %v948 = vmul.f32 %v866, 1.442695
      %v949 = vpow.pop %v948
      %v950 = vmul.f32 %v867, 1.442695
      %v951 = vpow.pop %v950
      %v952 = vmul.f32 %v868, 1.442695
      %v953 = vpow.pop %v952
      %v954 = vmul.f32 %v869, 1.442695
      %v955 = vpow.pop %v954
      %v956 = vmul.f32 %v870, 1.442695
      %v957 = vpow.pop %v956
      %v958 = vmul.f32 %v871, 1.442695
      %v959 = vpow.pop %v958
      %v960 = vmul.f32 %v872, 1.442695
      %v961 = vpow.pop %v960
      %v962 = vmul.f32 %v873, 1.442695
      %v963 = vpow.pop %v962
      %v964 = vmul.f32 %v874, 1.442695
      %v965 = vpow.pop %v964
      %v966 = vmul.f32 %v875, 1.442695
      %v967 = vpow.pop %v966
      %v968 = vmul.f32 %v876, 1.442695
      %v969 = vpow.pop %v968
      %v970 = vmul.f32 %v877, 1.442695
      %v971 = vpow.pop %v970
      %v972 = vmul.f32 %v878, 1.442695
      %v973 = vpow.pop %v972
      %v974 = vmul.f32 %v879, 1.442695
      %v975 = vpow.pop %v974
      %v976 = vmul.f32 %v880, 1.442695
      %v977 = vpow.pop %v976
      %v978 = vmul.f32 %v881, 1.442695
      %v979 = vpow.pop %v978
      %v980 = vmul.f32 %v882, 1.442695
      %v981 = vpow.pop %v980
      %v982 = vmul.f32 %v883, 1.442695
      %v983 = vpow.pop %v982
      %v984 = vmul.f32 %v884, 1.442695
      %v985 = vpow.pop %v984
      %v986 = vmul.f32 %v885, 1.442695
      %v987 = vpow.pop %v986
      %v988 = vmul.f32 %v886, 1.442695
      %v989 = vpow.pop %v988
      %v990 = vmul.f32 %v887, 1.442695
      %v991 = vpow.pop %v990
      %v992 = vmul.f32 %v888, 1.442695
      %v993 = vpow.pop %v992
      %v994 = vmul.f32 %v889, 1.442695
      %v995 = vpow.pop %v994
      %v996 = vmul.f32 %v890, 1.442695
      %v997 = vpow.pop %v996
      %v998 = vmul.f32 %v891, 1.442695
      %v999 = vpow.pop %v998
      %v1000 = vmul.f32 %v892, 1.442695
      %v1001 = vpow.pop %v1000
      %v1002 = vmul.f32 %v893, 1.442695
      %v1003 = vpow.pop %v1002
      %v1004 = vmul.f32 %v894, 1.442695
      %v1005 = vpow.pop %v1004
      %v1006 = vmul.f32 %v895, 1.442695
      %v1007 = vpow.pop %v1006
      %v1008 = vmul.f32 %v896, 1.442695
      %v1009 = vpow.pop %v1008
      %v1010 = vmul.f32 %v897, 1.442695
      %v1011 = vpow.pop %v1010
      %v1012 = vmul.f32 %v898, 1.442695
      %v1013 = vpow.pop %v1012
      %v1014 = vmul.f32 %v899, 1.442695
      %v1015 = vpow.pop %v1014
      %v1016 = vmul.f32 %v900, 1.442695
      %v1017 = vpow.pop %v1016
      %v1018 = vmul.f32 %v901, 1.442695
      %v1019 = vpow.pop %v1018
      %v1020 = vmul.f32 %v902, 1.442695
      %v1021 = vpow.pop %v1020
      %v1022 = vmul.f32 %v903, 1.442695
      %v1023 = vpow.pop %v1022
      %v1024 = vmul.f32 %v904, 1.442695
      %v1025 = vpow.pop %v1024
      %v1026 = vmul.f32 %v905, 1.442695
      %v1027 = vpow.pop %v1026
      %v1028 = vmul.f32 %v906, 1.442695
      %v1029 = vpow.pop %v1028
      %v1030 = vmul.f32 %v907, 1.442695
      %v1031 = vpow.pop %v1030
      %v1032 = vmul.f32 %v908, 1.442695
      %v1033 = vpow.pop %v1032
      %v1034 = vmul.f32 %v909, 1.442695
      %v1035 = vpow.pop %v1034
      %v1036 = vmul.f32 %v910, 1.442695
      %v1037 = vpow.pop %v1036
      %v1038 = vmul.f32 %v911, 1.442695
      %v1039 = vpow.pop %v1038
      %v1040 = vadd.f32 %v913, %v915
      %1041 = vadd.xlane.f32.xlu0 %v1040
      %v1042 = vpop.xlane.xlu0 %1041
      %v1043 = vadd.f32 %v917, %v919
      %1044 = vadd.xlane.f32.xlu0 %v1043
      %v1045 = vpop.xlane.xlu0 %1044
      %v1046 = vadd.f32 %v921, %v923
      %1047 = vadd.xlane.f32.xlu0 %v1046
      %v1048 = vpop.xlane.xlu0 %1047
      %v1049 = vadd.f32 %v925, %v927
      %1050 = vadd.xlane.f32.xlu0 %v1049
      %v1051 = vpop.xlane.xlu0 %1050
      %v1052 = vadd.f32 %v929, %v931
      %1053 = vadd.xlane.f32.xlu0 %v1052
      %v1054 = vpop.xlane.xlu0 %1053
      %v1055 = vadd.f32 %v933, %v935
      %1056 = vadd.xlane.f32.xlu0 %v1055
      %v1057 = vpop.xlane.xlu0 %1056
      %v1058 = vadd.f32 %v937, %v939
      %1059 = vadd.xlane.f32.xlu0 %v1058
      %v1060 = vpop.xlane.xlu0 %1059
      %v1061 = vadd.f32 %v941, %v943
      %1062 = vadd.xlane.f32.xlu0 %v1061
      %v1063 = vpop.xlane.xlu0 %1062
      %v1064 = vadd.f32 %v945, %v947
      %1065 = vadd.xlane.f32.xlu0 %v1064
      %v1066 = vpop.xlane.xlu0 %1065
      %v1067 = vadd.f32 %v949, %v951
      %1068 = vadd.xlane.f32.xlu0 %v1067
      %v1069 = vpop.xlane.xlu0 %1068
      %v1070 = vadd.f32 %v953, %v955
      %1071 = vadd.xlane.f32.xlu0 %v1070
      %v1072 = vpop.xlane.xlu0 %1071
      %v1073 = vadd.f32 %v957, %v959
      %1074 = vadd.xlane.f32.xlu0 %v1073
      %v1075 = vpop.xlane.xlu0 %1074
      %v1076 = vadd.f32 %v961, %v963
      %1077 = vadd.xlane.f32.xlu0 %v1076
      %v1078 = vpop.xlane.xlu0 %1077
      %v1079 = vadd.f32 %v965, %v967
      %1080 = vadd.xlane.f32.xlu0 %v1079
      %v1081 = vpop.xlane.xlu0 %1080
      %v1082 = vadd.f32 %v969, %v971
      %1083 = vadd.xlane.f32.xlu0 %v1082
      %v1084 = vpop.xlane.xlu0 %1083
      %v1085 = vadd.f32 %v973, %v975
      %1086 = vadd.xlane.f32.xlu0 %v1085
      %v1087 = vpop.xlane.xlu0 %1086
      %v1088 = vadd.f32 %v977, %v979
      %1089 = vadd.xlane.f32.xlu0 %v1088
      %v1090 = vpop.xlane.xlu0 %1089
      %v1091 = vadd.f32 %v981, %v983
      %1092 = vadd.xlane.f32.xlu0 %v1091
      %v1093 = vpop.xlane.xlu0 %1092
      %v1094 = vadd.f32 %v985, %v987
      %1095 = vadd.xlane.f32.xlu0 %v1094
      %v1096 = vpop.xlane.xlu0 %1095
      %v1097 = vadd.f32 %v989, %v991
      %1098 = vadd.xlane.f32.xlu0 %v1097
      %v1099 = vpop.xlane.xlu0 %1098
      %v1100 = vadd.f32 %v993, %v995
      %1101 = vadd.xlane.f32.xlu0 %v1100
      %v1102 = vpop.xlane.xlu0 %1101
      %v1103 = vadd.f32 %v997, %v999
      %1104 = vadd.xlane.f32.xlu0 %v1103
      %v1105 = vpop.xlane.xlu0 %1104
      %v1106 = vadd.f32 %v1001, %v1003
      %1107 = vadd.xlane.f32.xlu0 %v1106
      %v1108 = vpop.xlane.xlu0 %1107
      %v1109 = vadd.f32 %v1005, %v1007
      %1110 = vadd.xlane.f32.xlu0 %v1109
      %v1111 = vpop.xlane.xlu0 %1110
      %v1112 = vadd.f32 %v1009, %v1011
      %1113 = vadd.xlane.f32.xlu0 %v1112
      %v1114 = vpop.xlane.xlu0 %1113
      %v1115 = vadd.f32 %v1013, %v1015
      %1116 = vadd.xlane.f32.xlu0 %v1115
      %v1117 = vpop.xlane.xlu0 %1116
      %v1118 = vadd.f32 %v1017, %v1019
      %1119 = vadd.xlane.f32.xlu0 %v1118
      %v1120 = vpop.xlane.xlu0 %1119
      %v1121 = vadd.f32 %v1021, %v1023
      %1122 = vadd.xlane.f32.xlu0 %v1121
      %v1123 = vpop.xlane.xlu0 %1122
      %v1124 = vadd.f32 %v1025, %v1027
      %1125 = vadd.xlane.f32.xlu0 %v1124
      %v1126 = vpop.xlane.xlu0 %1125
      %v1127 = vadd.f32 %v1029, %v1031
      %1128 = vadd.xlane.f32.xlu0 %v1127
      %v1129 = vpop.xlane.xlu0 %1128
      %v1130 = vadd.f32 %v1033, %v1035
      %1131 = vadd.xlane.f32.xlu0 %v1130
      %v1132 = vpop.xlane.xlu0 %1131
      %v1133 = vadd.f32 %v1037, %v1039
      %1134 = vadd.xlane.f32.xlu0 %v1133
      %v1135 = vpop.xlane.xlu0 %1134
      %v1136 = vrcp.pop %v1042
      %v1137 = vrcp.pop %v1045
      %v1138 = vrcp.pop %v1048
      %v1139 = vrcp.pop %v1051
      %v1140 = vrcp.pop %v1054
      %v1141 = vrcp.pop %v1057
      %v1142 = vrcp.pop %v1060
      %v1143 = vrcp.pop %v1063
      %v1144 = vrcp.pop %v1066
      %v1145 = vrcp.pop %v1069
      %v1146 = vrcp.pop %v1072
      %v1147 = vrcp.pop %v1075
      %v1148 = vrcp.pop %v1078
      %v1149 = vrcp.pop %v1081
      %v1150 = vrcp.pop %v1084
      %v1151 = vrcp.pop %v1087
      %v1152 = vrcp.pop %v1090
      %v1153 = vrcp.pop %v1093
      %v1154 = vrcp.pop %v1096
      %v1155 = vrcp.pop %v1099
      %v1156 = vrcp.pop %v1102
      %v1157 = vrcp.pop %v1105
      %v1158 = vrcp.pop %v1108
      %v1159 = vrcp.pop %v1111
      %v1160 = vrcp.pop %v1114
      %v1161 = vrcp.pop %v1117
      %v1162 = vrcp.pop %v1120
      %v1163 = vrcp.pop %v1123
      %v1164 = vrcp.pop %v1126
      %v1165 = vrcp.pop %v1129
      %v1166 = vrcp.pop %v1132
      %v1167 = vrcp.pop %v1135
      %v1168 = vmul.f32 %v913, %v1136
      %v1169 = vmul.f32 %v915, %v1136
      %v1170 = vmul.f32 %v917, %v1137
      %v1171 = vmul.f32 %v919, %v1137
      %v1172 = vmul.f32 %v921, %v1138
      %v1173 = vmul.f32 %v923, %v1138
      %v1174 = vmul.f32 %v925, %v1139
      %v1175 = vmul.f32 %v927, %v1139
      %v1176 = vmul.f32 %v929, %v1140
      %v1177 = vmul.f32 %v931, %v1140
      %v1178 = vmul.f32 %v933, %v1141
      %v1179 = vmul.f32 %v935, %v1141
      %v1180 = vmul.f32 %v937, %v1142
      %v1181 = vmul.f32 %v939, %v1142
      %v1182 = vmul.f32 %v941, %v1143
      %v1183 = vmul.f32 %v943, %v1143
      %v1184 = vmul.f32 %v945, %v1144
      %v1185 = vmul.f32 %v947, %v1144
      %v1186 = vmul.f32 %v949, %v1145
      %v1187 = vmul.f32 %v951, %v1145
      %v1188 = vmul.f32 %v953, %v1146
      %v1189 = vmul.f32 %v955, %v1146
      %v1190 = vmul.f32 %v957, %v1147
      %v1191 = vmul.f32 %v959, %v1147
      %v1192 = vmul.f32 %v961, %v1148
      %v1193 = vmul.f32 %v963, %v1148
      %v1194 = vmul.f32 %v965, %v1149
      %v1195 = vmul.f32 %v967, %v1149
      %v1196 = vmul.f32 %v969, %v1150
      %v1197 = vmul.f32 %v971, %v1150
      %v1198 = vmul.f32 %v973, %v1151
      %v1199 = vmul.f32 %v975, %v1151
      %v1200 = vmul.f32 %v977, %v1152
      %v1201 = vmul.f32 %v979, %v1152
      %v1202 = vmul.f32 %v981, %v1153
      %v1203 = vmul.f32 %v983, %v1153
      %v1204 = vmul.f32 %v985, %v1154
      %v1205 = vmul.f32 %v987, %v1154
      %v1206 = vmul.f32 %v989, %v1155
      %v1207 = vmul.f32 %v991, %v1155
      %v1208 = vmul.f32 %v993, %v1156
      %v1209 = vmul.f32 %v995, %v1156
      %v1210 = vmul.f32 %v997, %v1157
      %v1211 = vmul.f32 %v999, %v1157
      %v1212 = vmul.f32 %v1001, %v1158
      %v1213 = vmul.f32 %v1003, %v1158
      %v1214 = vmul.f32 %v1005, %v1159
      %v1215 = vmul.f32 %v1007, %v1159
      %v1216 = vmul.f32 %v1009, %v1160
      %v1217 = vmul.f32 %v1011, %v1160
      %v1218 = vmul.f32 %v1013, %v1161
      %v1219 = vmul.f32 %v1015, %v1161
      %v1220 = vmul.f32 %v1017, %v1162
      %v1221 = vmul.f32 %v1019, %v1162
      %v1222 = vmul.f32 %v1021, %v1163
      %v1223 = vmul.f32 %v1023, %v1163
      %v1224 = vmul.f32 %v1025, %v1164
      %v1225 = vmul.f32 %v1027, %v1164
      %v1226 = vmul.f32 %v1029, %v1165
      %v1227 = vmul.f32 %v1031, %v1165
      %v1228 = vmul.f32 %v1033, %v1166
      %v1229 = vmul.f32 %v1035, %v1166
      %v1230 = vmul.f32 %v1037, %v1167
      %v1231 = vmul.f32 %v1039, %v1167
      %v1232 = vpack.c.bf16 %v1170, %v1168
      %v1233 = vpack.c.bf16 %v1171, %v1169
      %v1234 = vpack.c.bf16 %v1174, %v1172
      %v1235 = vpack.c.bf16 %v1175, %v1173
      %v1236 = vpack.c.bf16 %v1178, %v1176
      %v1237 = vpack.c.bf16 %v1179, %v1177
      %v1238 = vpack.c.bf16 %v1182, %v1180
      %v1239 = vpack.c.bf16 %v1183, %v1181
      %v1240 = vpack.c.bf16 %v1186, %v1184
      %v1241 = vpack.c.bf16 %v1187, %v1185
      %v1242 = vpack.c.bf16 %v1190, %v1188
      %v1243 = vpack.c.bf16 %v1191, %v1189
      %v1244 = vpack.c.bf16 %v1194, %v1192
      %v1245 = vpack.c.bf16 %v1195, %v1193
      %v1246 = vpack.c.bf16 %v1198, %v1196
      %v1247 = vpack.c.bf16 %v1199, %v1197
      %v1248 = vpack.c.bf16 %v1202, %v1200
      %v1249 = vpack.c.bf16 %v1203, %v1201
      %v1250 = vpack.c.bf16 %v1206, %v1204
      %v1251 = vpack.c.bf16 %v1207, %v1205
      %v1252 = vpack.c.bf16 %v1210, %v1208
      %v1253 = vpack.c.bf16 %v1211, %v1209
      %v1254 = vpack.c.bf16 %v1214, %v1212
      %v1255 = vpack.c.bf16 %v1215, %v1213
      %v1256 = vpack.c.bf16 %v1218, %v1216
      %v1257 = vpack.c.bf16 %v1219, %v1217
      %v1258 = vpack.c.bf16 %v1222, %v1220
      %v1259 = vpack.c.bf16 %v1223, %v1221
      %v1260 = vpack.c.bf16 %v1226, %v1224
      %v1261 = vpack.c.bf16 %v1227, %v1225
      %v1262 = vpack.c.bf16 %v1230, %v1228
      %v1263 = vpack.c.bf16 %v1231, %v1229
      %v1272 = vunpack.c.l.b16 %v390
      %v1273 = vunpack.c.h.b16 %v390
      %v1274 = vunpack.c.l.b16 %v391
      %v1275 = vunpack.c.h.b16 %v391
      %v1276 = vunpack.c.l.b16 %v392
      %v1277 = vunpack.c.h.b16 %v392
      %v1278 = vunpack.c.l.b16 %v393
      %v1279 = vunpack.c.h.b16 %v393
      %v1280 = vunpack.c.l.b16 %v394
      %v1281 = vunpack.c.h.b16 %v394
      %v1282 = vunpack.c.l.b16 %v395
      %v1283 = vunpack.c.h.b16 %v395
      %v1284 = vunpack.c.l.b16 %v396
      %v1285 = vunpack.c.h.b16 %v396
      %v1286 = vunpack.c.l.b16 %v397
      %v1287 = vunpack.c.h.b16 %v397
      %v1288 = vpack.c.b16 %v1274, %v1272
      %v1289 = vpack.c.b16 %v1275, %v1273
      %v1290 = vpack.c.b16 %v1278, %v1276
      %v1291 = vpack.c.b16 %v1279, %v1277
      %v1292 = vpack.c.b16 %v1282, %v1280
      %v1293 = vpack.c.b16 %v1283, %v1281
      %v1294 = vpack.c.b16 %v1286, %v1284
      %v1295 = vpack.c.b16 %v1287, %v1285
      %1304 = vmatprep.subr.bf16.mxu0 %v1247
      %1305 = vmatpush1.bf16.xpose.msra.mxu0 %v1246
      %1306 = vmatprep.subr.bf16.mxu0 %v1245
      %1307 = vmatpush1.bf16.xpose.msra.mxu0 %v1244
      %1308 = vmatprep.subr.bf16.mxu0 %v1243
      %1309 = vmatpush1.bf16.xpose.msra.mxu0 %v1242
      %1310 = vmatprep.subr.bf16.mxu0 %v1241
      %1311 = vmatpush1.bf16.xpose.msra.mxu0 %v1240
      %1312 = vmatprep.subr.bf16.mxu0 %v1239
      %1313 = vmatpush1.bf16.xpose.msra.mxu0 %v1238
      %1314 = vmatprep.subr.bf16.mxu0 %v1237
      %1315 = vmatpush1.bf16.xpose.msra.mxu0 %v1236
      %1316 = vmatprep.subr.bf16.mxu0 %v1235
      %1317 = vmatpush1.bf16.xpose.msra.mxu0 %v1234
      %1318 = vmatprep.subr.bf16.mxu0 %v1233
      %1319 = vmatpush1.bf16.xpose.msra.mxu0 %v1232
      %1320 = vmatprep.subr.bf16.mxu0 %v1263
      %1321 = vmatpush2.bf16.xpose.msra.mxu0 %v1262
      %1322 = vmatprep.subr.bf16.mxu0 %v1261
      %1323 = vmatpush2.bf16.xpose.msra.mxu0 %v1260
      %1324 = vmatprep.subr.bf16.mxu0 %v1259
      %1325 = vmatpush2.bf16.xpose.msra.mxu0 %v1258
      %1326 = vmatprep.subr.bf16.mxu0 %v1257
      %1327 = vmatpush2.bf16.xpose.msra.mxu0 %v1256
      %1328 = vmatprep.subr.bf16.mxu0 %v1255
      %1329 = vmatpush2.bf16.xpose.msra.mxu0 %v1254
      %1330 = vmatprep.subr.bf16.mxu0 %v1253
      %1331 = vmatpush2.bf16.xpose.msra.mxu0 %v1252
      %1332 = vmatprep.subr.bf16.mxu0 %v1251
      %1333 = vmatpush2.bf16.xpose.msra.mxu0 %v1250
      %1334 = vmatprep.subr.bf16.mxu0 %v1249
      %1335 = vmatpush2.bf16.xpose.msra.mxu0 %v1248
      %1336 = vmatprep.mubr.bf16.mxu0 %v1289
      %1337 = vmatmul.mubr.bf16.gmra.mxu0 %v1288
      %v1338 = vpop.f32.mrf.mxu0
      %v1339 = vadd.f32 0.0, %v1338
      %v1340 = vpop.f32.mrf.mxu0
      %v1341 = vadd.f32 0.0, %v1340
      %v1342 = vpop.f32.mrf.mxu0
      %v1343 = vadd.f32 0.0, %v1342
      %v1344 = vpop.f32.mrf.mxu0
      %v1345 = vadd.f32 0.0, %v1344
      %1346 = vmatprep.mubr.bf16.mxu0 %v1291
      %1347 = vmatmul.mubr.bf16.gmra.mxu0 %v1290
      %v1348 = vpop.f32.mrf.mxu0
      %v1349 = vadd.f32 0.0, %v1348
      %v1350 = vpop.f32.mrf.mxu0
      %v1351 = vadd.f32 0.0, %v1350
      %v1352 = vpop.f32.mrf.mxu0
      %v1353 = vadd.f32 0.0, %v1352
      %v1354 = vpop.f32.mrf.mxu0
      %v1355 = vadd.f32 0.0, %v1354
      %1356 = vmatprep.mubr.bf16.mxu0 %v1293
      %1357 = vmatmul.mubr.bf16.gmra.mxu0 %v1292
      %v1358 = vpop.f32.mrf.mxu0
      %v1359 = vadd.f32 0.0, %v1358
      %v1360 = vpop.f32.mrf.mxu0
      %v1361 = vadd.f32 0.0, %v1360
      %v1362 = vpop.f32.mrf.mxu0
      %v1363 = vadd.f32 0.0, %v1362
      %v1364 = vpop.f32.mrf.mxu0
      %v1365 = vadd.f32 0.0, %v1364
      %1366 = vmatprep.mubr.bf16.mxu0 %v1295
      %1367 = vmatmul.mubr.bf16.gmra.mxu0 %v1294
      %v1368 = vpop.f32.mrf.mxu0
      %v1369 = vadd.f32 0.0, %v1368
      %v1370 = vpop.f32.mrf.mxu0
      %v1371 = vadd.f32 0.0, %v1370
      %v1372 = vpop.f32.mrf.mxu0
      %v1373 = vadd.f32 0.0, %v1372
      %v1374 = vpop.f32.mrf.mxu0
      %v1375 = vadd.f32 0.0, %v1374
      %1376 = vdwg.mxu0
      %v1377 = vld [vmem:[%s3] sm:$0xf]
      %v1378 = vld [vmem:[%s3 + $0x4] sm:$0xf]
      %v1379 = vld [vmem:[%s3 + $0x8] sm:$0xf]
      %v1380 = vld [vmem:[%s3 + $0xc] sm:$0xf]
      %v1381 = vld [vmem:[%s3 + $0x10] sm:$0xf]
      %v1382 = vld [vmem:[%s3 + $0x14] sm:$0xf]
      %v1383 = vld [vmem:[%s3 + $0x18] sm:$0xf]
      %v1384 = vld [vmem:[%s3 + $0x1c] sm:$0xf]
      %v1385 = vpack.c.bf16 %v1343, %v1339
      %v1386 = vpack.c.bf16 %v1345, %v1341
      %v1387 = vpack.c.bf16 %v1353, %v1349
      %v1388 = vpack.c.bf16 %v1355, %v1351
      %v1389 = vpack.c.bf16 %v1363, %v1359
      %v1390 = vpack.c.bf16 %v1365, %v1361
      %v1391 = vpack.c.bf16 %v1373, %v1369
      %v1392 = vpack.c.bf16 %v1375, %v1371
      %v1393 = vld [vmem:[%s4] sm:$0xff]
      %v1394 = vld [vmem:[%s4 + $0x8] sm:$0xff]
      %v1395 = vld [vmem:[%s4 + $0x10] sm:$0xff]
      %v1396 = vld [vmem:[%s4 + $0x18] sm:$0xff]
      %v1397 = vld [vmem:[%s4 + $0x20] sm:$0xff]
      %v1398 = vld [vmem:[%s4 + $0x28] sm:$0xff]
      %v1399 = vld [vmem:[%s4 + $0x30] sm:$0xff]
      %v1400 = vld [vmem:[%s4 + $0x38] sm:$0xff]
      %1402 = vset.pattern.permute.xlu0 0
      %1403 = vperm.xlu0 %1402, %v1393
      %v1404 = vpop.permute.xlu0 %1403
      %1407 = vset.pattern.permute.xlu0 0
      %1408 = vperm.xlu0 %1407, %v1394
      %v1409 = vpop.permute.xlu0 %1408
      %1412 = vset.pattern.permute.xlu0 0
      %1413 = vperm.xlu0 %1412, %v1395
      %v1414 = vpop.permute.xlu0 %1413
      %1417 = vset.pattern.permute.xlu0 0
      %1418 = vperm.xlu0 %1417, %v1396
      %v1419 = vpop.permute.xlu0 %1418
      %1422 = vset.pattern.permute.xlu0 0
      %1423 = vperm.xlu0 %1422, %v1397
      %v1424 = vpop.permute.xlu0 %1423
      %1427 = vset.pattern.permute.xlu0 0
      %1428 = vperm.xlu0 %1427, %v1398
      %v1429 = vpop.permute.xlu0 %1428
      %1432 = vset.pattern.permute.xlu0 0
      %1433 = vperm.xlu0 %1432, %v1399
      %v1434 = vpop.permute.xlu0 %1433
      %1437 = vset.pattern.permute.xlu0 0
      %1438 = vperm.xlu0 %1437, %v1400
      %v1439 = vpop.permute.xlu0 %1438
      %v1449 = vunpack.c.l.b16 %v1377
      %v1450 = vunpack.c.l.b16 %v1378
      %v1451 = vunpack.c.l.b16 %v1379
      %v1452 = vunpack.c.l.b16 %v1380
      %v1453 = vunpack.c.l.b16 %v1381
      %v1454 = vunpack.c.l.b16 %v1382
      %v1455 = vunpack.c.l.b16 %v1383
      %v1456 = vunpack.c.l.b16 %v1384
      %v1457 = vpack.c.b16 %v1450, %v1449
      %v1458 = vpack.c.b16 %v1452, %v1451
      %v1459 = vpack.c.b16 %v1454, %v1453
      %v1460 = vpack.c.b16 %v1456, %v1455
      %v1462 = vsel %vm510, %v1457, 0
      %v1465 = vsel %vm510, %v1458, 0
      %v1468 = vsel %vm510, %v1459, 0
      %v1471 = vsel %vm510, %v1460, 0
      %1473 = vmatprep.subr.bf16.mxu0 0
      %1474 = vmatpush1.bf16.msra.mxu0 0
      %1475 = vmatprep.subr.bf16.mxu0 0
      %1476 = vmatpush1.bf16.msra.mxu0 0
      %1477 = vmatprep.subr.bf16.mxu0 0
      %1478 = vmatpush1.bf16.msra.mxu0 0
      %1479 = vmatprep.subr.bf16.mxu0 0
      %1480 = vmatpush1.bf16.msra.mxu0 0
      %1481 = vmatprep.subr.bf16.mxu0 %v1392
      %1482 = vmatpush1.bf16.msra.mxu0 %v1391
      %1483 = vmatprep.subr.bf16.mxu0 %v1390
      %1484 = vmatpush1.bf16.msra.mxu0 %v1389
      %1485 = vmatprep.subr.bf16.mxu0 %v1388
      %1486 = vmatpush1.bf16.msra.mxu0 %v1387
      %1487 = vmatprep.subr.bf16.mxu0 %v1386
      %1488 = vmatpush1.bf16.msra.mxu0 %v1385
      %1489 = vmatprep.subr.bf16.mxu0 0
      %1490 = vmatpush2.bf16.msra.mxu0 0
      %1491 = vmatprep.subr.bf16.mxu0 0
      %1492 = vmatpush2.bf16.msra.mxu0 0
      %1493 = vmatprep.subr.bf16.mxu0 0
      %1494 = vmatpush2.bf16.msra.mxu0 0
      %1495 = vmatprep.subr.bf16.mxu0 0
      %1496 = vmatpush2.bf16.msra.mxu0 0
      %1497 = vmatprep.subr.bf16.mxu0 0
      %1498 = vmatpush2.bf16.msra.mxu0 0
      %1499 = vmatprep.subr.bf16.mxu0 0
      %1500 = vmatpush2.bf16.msra.mxu0 0
      %1501 = vmatprep.subr.bf16.mxu0 0
      %1502 = vmatpush2.bf16.msra.mxu0 0
      %1503 = vmatprep.subr.bf16.mxu0 0
      %1504 = vmatpush2.bf16.msra.mxu0 0
      %1505 = vmatprep.mubr.bf16.mxu0 0
      %1506 = vmatmul.mubr.bf16.gmra.mxu0 %v1462
      %v1507 = vpop.f32.mrf.mxu0
      %v1508 = vadd.f32 %v1404, %v1507
      %v1509 = vpop.f32.mrf.mxu0
      %v1510 = vadd.f32 %v1404, %v1509
      %v1511 = vpop.f32.mrf.mxu0
      %v1512 = vadd.f32 %v1409, %v1511
      %v1513 = vpop.f32.mrf.mxu0
      %v1514 = vadd.f32 %v1409, %v1513
      %1515 = vmatprep.mubr.bf16.mxu0 0
      %1516 = vmatmul.mubr.bf16.gmra.mxu0 %v1465
      %v1517 = vpop.f32.mrf.mxu0
      %v1518 = vadd.f32 %v1414, %v1517
      %v1519 = vpop.f32.mrf.mxu0
      %v1520 = vadd.f32 %v1414, %v1519
      %v1521 = vpop.f32.mrf.mxu0
      %v1522 = vadd.f32 %v1419, %v1521
      %v1523 = vpop.f32.mrf.mxu0
      %v1524 = vadd.f32 %v1419, %v1523
      %1525 = vmatprep.mubr.bf16.mxu0 0
      %1526 = vmatmul.mubr.bf16.gmra.mxu0 %v1468
      %v1527 = vpop.f32.mrf.mxu0
      %v1528 = vadd.f32 %v1424, %v1527
      %v1529 = vpop.f32.mrf.mxu0
      %v1530 = vadd.f32 %v1424, %v1529
      %v1531 = vpop.f32.mrf.mxu0
      %v1532 = vadd.f32 %v1429, %v1531
      %v1533 = vpop.f32.mrf.mxu0
      %v1534 = vadd.f32 %v1429, %v1533
      %1535 = vmatprep.mubr.bf16.mxu0 0
      %1536 = vmatmul.mubr.bf16.gmra.mxu0 %v1471
      %v1537 = vpop.f32.mrf.mxu0
      %v1538 = vadd.f32 %v1434, %v1537
      %v1539 = vpop.f32.mrf.mxu0
      %v1540 = vadd.f32 %v1434, %v1539
      %v1541 = vpop.f32.mrf.mxu0
      %v1542 = vadd.f32 %v1439, %v1541
      %v1543 = vpop.f32.mrf.mxu0
      %v1544 = vadd.f32 %v1439, %v1543
      %1545 = vdwg.mxu0
      %v1546 = vld [vmem:[%s361] sm:$0xff]
      %v1547 = vld [vmem:[%s361 + $0x8] sm:$0xff]
      %v1548 = vld [vmem:[%s361 + $0x10] sm:$0xff]
      %v1549 = vld [vmem:[%s361 + $0x18] sm:$0xff]
      %v1550 = vld [vmem:[%s361 + $0x20] sm:$0xff]
      %v1551 = vld [vmem:[%s361 + $0x28] sm:$0xff]
      %v1552 = vld [vmem:[%s361 + $0x30] sm:$0xff]
      %v1553 = vld [vmem:[%s361 + $0x38] sm:$0xff]
      %v1554 = vld [vmem:[%s361 + $0x40] sm:$0xff]
      %v1555 = vld [vmem:[%s361 + $0x48] sm:$0xff]
      %v1556 = vld [vmem:[%s361 + $0x50] sm:$0xff]
      %v1557 = vld [vmem:[%s361 + $0x58] sm:$0xff]
      %v1558 = vld [vmem:[%s361 + $0x60] sm:$0xff]
      %v1559 = vld [vmem:[%s361 + $0x68] sm:$0xff]
      %v1560 = vld [vmem:[%s361 + $0x70] sm:$0xff]
      %v1561 = vld [vmem:[%s361 + $0x78] sm:$0xff]
      %v1562 = vadd.f32 %v1508, %v1546
      %v1563 = vadd.f32 %v1510, %v1547
      %v1564 = vadd.f32 %v1512, %v1548
      %v1565 = vadd.f32 %v1514, %v1549
      %v1566 = vadd.f32 %v1518, %v1550
      %v1567 = vadd.f32 %v1520, %v1551
      %v1568 = vadd.f32 %v1522, %v1552
      %v1569 = vadd.f32 %v1524, %v1553
      %v1570 = vadd.f32 %v1528, %v1554
      %v1571 = vadd.f32 %v1530, %v1555
      %v1572 = vadd.f32 %v1532, %v1556
      %v1573 = vadd.f32 %v1534, %v1557
      %v1574 = vadd.f32 %v1538, %v1558
      %v1575 = vadd.f32 %v1540, %v1559
      %v1576 = vadd.f32 %v1542, %v1560
      %v1577 = vadd.f32 %v1544, %v1561
      %1578 = vst [vmem:[%s371] sm:$0xff] %v1562
      %1579 = vst [vmem:[%s371 + $0x8] sm:$0xff] %v1563
      %1580 = vst [vmem:[%s371 + $0x10] sm:$0xff] %v1564
      %1581 = vst [vmem:[%s371 + $0x18] sm:$0xff] %v1565
      %1582 = vst [vmem:[%s371 + $0x20] sm:$0xff] %v1566
      %1583 = vst [vmem:[%s371 + $0x28] sm:$0xff] %v1567
      %1584 = vst [vmem:[%s371 + $0x30] sm:$0xff] %v1568
      %1585 = vst [vmem:[%s371 + $0x38] sm:$0xff] %v1569
      %1586 = vst [vmem:[%s371 + $0x40] sm:$0xff] %v1570
      %1587 = vst [vmem:[%s371 + $0x48] sm:$0xff] %v1571
      %1588 = vst [vmem:[%s371 + $0x50] sm:$0xff] %v1572
      %1589 = vst [vmem:[%s371 + $0x58] sm:$0xff] %v1573
      %1590 = vst [vmem:[%s371 + $0x60] sm:$0xff] %v1574
      %1591 = vst [vmem:[%s371 + $0x68] sm:$0xff] %v1575
      %1592 = vst [vmem:[%s371 + $0x70] sm:$0xff] %v1576
      %1593 = vst [vmem:[%s371 + $0x78] sm:$0xff] %v1577
      %s1594 = smul.u32 2, %s22
      %p1595 = scmp.lt.s32.totalorder %s21, 1
      %s1596 = scalar_select %p1595, %s21, 1
      %p1597 = scmp.lt.s32.totalorder %s1594, 1
      %s1598 = scalar_select %p1597, %s1594, 1
      %s1599 = smul.addr %s1596, 16
      %s1600 = sadd.s32 %s1598, %s1599
      %s1601 = smul.addr %s1600, 8
      %s1602 = scalar_lea.vmem %s6, %s1601
      // Predicated region
      $region45: #{_forward.3} parent=43 // pred_check
        %p1603 = pneg %p199
      $region46: #{_forward.3} parent=43 // pred_check_branch
        %1605 = sbr.rel (%p1603) target = $region48
      $region47: #{_forward.3} parent=43 // pred_region
        %s1606 = smul.u32 2, %s22
      $region48: #{_forward.3} parent=43 // pred_fallthru
        _
    $region44: #{_forward.3} parent=5 // pred_fallthru
      _
    %p1607 = scmp.le.s32.totalorder 2, %s12
    // Predicated region
    $region49: #{_forward.3} parent=5 // pred_check
      %p1608 = pneg %p1607
    $region50: #{_forward.3} parent=5 // pred_check_branch
      %1610 = sbr.rel (%p1608) target = $region52
    $region51: #{_forward.3} parent=5 // pred_region
      %s1611 = ssub.s32 %s12, 2
      // Predicated region
      $region53: #{_forward.3} parent=51 // pred_check
        %p1612 = pneg %p205
      $region54: #{_forward.3} parent=51 // pred_check_branch
        %1614 = sbr.rel (%p1612) target = $region56
      $region55: #{_forward.3} parent=51 // pred_region
        %s1615 = smul.u32 2, %s24
        %p1616 = scmp.lt.s32.totalorder %s23, 1
        %s1617 = scalar_select %p1616, %s23, 1
        %p1618 = scmp.lt.s32.totalorder %s1615, 1
        %s1619 = scalar_select %p1618, %s1615, 1
        %s1620 = smul.addr %s1617, 16
        %s1621 = sadd.s32 %s1619, %s1620
        %s1622 = smul.addr %s1621, 8
        %s1623 = scalar_lea.vmem %s6, %s1622
      $region56: #{_forward.3} parent=51 // pred_fallthru
        _
    $region52: #{_forward.3} parent=5 // pred_fallthru
      _
  $region6: #{_forward.3} parent=0 // loop_footer
    %s16 = sadd.s32 1, %s12
  $region7: #{_forward.3} parent=0 // loop_footer_branch
    %11 = sbr.rel target = $region3
  $region8: #{_forward.3} parent=0 // loop_exit
    _

</llo_original>
